<compile_context>
chip_gen: v7x
topology: tpu7x:2x2x1
jax: 0.10.0
libtpu: 0.0.40
codegen_flags: <defaults>
</compile_context>

<pallas_src>
import functools

import jax
import jax.numpy as jnp
import numpy as np
from jax.experimental import pallas as pl
from jax.experimental.pallas import tpu as pltpu


def _scouter_kernel(w1_ref, b1_ref, w2_ref, b2_ref, sw_ref, c3_ref,
                    a_ref, x_ref, upd_ref, attn_ref, *,
                    scale, eps, n_valid, fuse_pe, compute_dtype):
    """One grid step == `tb` batch elements.

    a_ref is either the (tb, n_pad, d) inputs_pe block (fuse_pe=False) or the
    shared (n_pad, d) positional-embedding block (fuse_pe=True, in which case
    inputs_pe = inputs + pos_embed is formed in-register from the single
    streamed `inputs` block).
    """
    tb, n_pad, d = x_ref.shape
    s = sw_ref.shape[0]
    f32 = jnp.float32
    cd = compute_dtype

    x = x_ref[...]                                   # (tb, n_pad, d), compute dtype
    if fuse_pe:
        xpe = x + a_ref[...][None]                   # PE shared across the batch
    else:
        xpe = a_ref[...]                             # inputs_pe block

    # ---- to_k MLP.  Layers 1 & 2 run as wide (tb*n_pad, d) GEMMs (f32 MXU
    # accumulation); the third Linear is fused with the slot projection, so
    # `k` is never materialized. ----
    h = jnp.dot(xpe.reshape(tb * n_pad, d), w1_ref[...],
                preferred_element_type=f32)
    h = jnp.maximum(h + b1_ref[...], 0.0).astype(cd)
    h = jnp.dot(h, w2_ref[...], preferred_element_type=f32)
    h = jnp.maximum(h + b2_ref[...], 0.0).astype(cd)
    h = h.reshape(tb, n_pad, d)

    # dots[b,i,j] = sum_e h[b,j,e] * slots_w3[i,e] + c3[i]   (exact fusion of
    # slots @ (h@W3 + b3).T).  Batched contraction over d -> (tb, s, n_pad),
    # already lane-dense over the token dim.
    sw = jnp.broadcast_to(sw_ref[...][None], (tb, s, d))
    dots = jnp.einsum('bsd,bnd->bsn', sw, h,
                      preferred_element_type=f32) + c3_ref[...]

    # Padded token columns (lane >= n_valid) must not contribute to any sum.
    if n_pad > n_valid:
        valid = jax.lax.broadcasted_iota(jnp.int32, (tb, s, n_pad), 2) < n_valid
        dots = jnp.where(valid, dots, 0.0)
    else:
        valid = None

    # ---- dots <- dots / row_sum * (total * 1/sqrt(d)).  The 1/sqrt(d) scale
    # cancels from dots/row_sum and is folded into the scalar total; the two
    # full-tile divides collapse to one (tb, s, 1) reciprocal + a multiply. ----
    row_sum = jnp.sum(dots, axis=-1, keepdims=True)             # (tb, s, 1)
    total = jnp.sum(row_sum, axis=1, keepdims=True)             # (tb, 1, 1)
    # Guard exact-zero rows (all-zero padded batch rows / degenerate inputs);
    # the PyTorch reference would produce NaN there.
    row_safe = jnp.where(row_sum == 0.0, 1.0, row_sum)
    dots = dots * ((total * scale) / row_safe)

    attn = jax.nn.sigmoid(dots)                                 # (tb, s, n_pad)
    if valid is not None:
        attn = jnp.where(valid, attn, 0.0)    # sigmoid(0)=0.5 at padded lanes
    attn2 = attn * (1.0 / (jnp.sum(attn, axis=-1, keepdims=True) + eps))

    # updates = einsum('bjd,bij->bid', inputs, attn2) == attn2 @ inputs.
    # Padded attn2 columns and padded input rows are exactly zero.
    updates = jnp.einsum('bsn,bnd->bsd', attn2.astype(cd), x,
                         preferred_element_type=f32)            # (tb, s, d)

    upd_ref[...] = updates.astype(upd_ref.dtype)
    # n_pad is a multiple of 128 -> unmasked lane-dense vst for attn.
    attn_ref[...] = attn.astype(attn_ref.dtype)


def scouter_attention(inputs_pe, inputs, initial_slots, to_k_params, *,
                      pos_embed=None, eps=1e-8, iters=3, batch_block=None,
                      compute_dtype=jnp.float32, out_dtype=jnp.float32,
                      vmem_budget_bytes=48 * 1024 * 1024):
    """ScouterAttention forward.

    inputs_pe, inputs : (b, n, d).  If `pos_embed` ((n, d) or (1, n, d)) is
    given, inputs_pe may be None and is formed in-kernel as inputs + pos_embed
    (halves the streamed HBM traffic).
    initial_slots : (num_concepts, d).
    to_k_params   : 3x (W, b) with y = x @ W + b  (W = torch_weight.T).
    """
    del iters  # the PyTorch loop never updates `slots` -> one pass is exact
    b, n, d = inputs.shape
    s = initial_slots.shape[0]
    scale = float(d) ** (-0.5)
    fuse_pe = pos_embed is not None
    cd = compute_dtype
    f32 = jnp.float32
    hi = jax.lax.Precision.HIGHEST

    (w1, b1), (w2, b2), (w3, b3) = to_k_params
    b1 = b1.reshape(1, d).astype(f32)
    b2 = b2.reshape(1, d).astype(f32)

    # Fuse the third Linear with the slot projection (exact algebra):
    #   dots[b,i,j] = sum_e h[b,j,e] * (slots @ W3.T)[i,e] + (slots @ b3)[i]
    slots_f = initial_slots.astype(f32)
    slots_w3 = jnp.einsum('so,eo->se', slots_f, w3.astype(f32),
                          precision=hi)                                # (s, d)
    c3 = jnp.einsum('so,o->s', slots_f, b3.reshape(d).astype(f32),
                    precision=hi).reshape(s, 1)                        # (s, 1)

    # Cast MXU operands in the wrapper (weights + streamed activations) so a
    # bf16 compute_dtype halves the dominant HBM streams as well as weight
    # DMA; biases / elementwise math stay f32.
    w1 = w1.astype(cd)
    w2 = w2.astype(cd)
    slots_w3_c = slots_w3.astype(cd)
    inputs = inputs.astype(cd)
    if fuse_pe:
        pe = jnp.asarray(pos_embed).reshape(n, d).astype(cd)
    else:
        inputs_pe = inputs_pe.astype(cd)

    # Lane-dense attn layout: pad the token dim to a multiple of 128.  The
    # feature dim d is deliberately NOT padded (would inflate HBM traffic on a
    # memory-bound kernel; real configs already have d % 128 == 0).
    n_pad = ((n + 127) // 128) * 128

    # Batch tile: largest tb whose double-buffered working set fits the VMEM
    # budget (48 MiB default also fits v7x's 64 MiB VMEM; raise it on
    # single-TC v5e/v6e).  On v7x prefer an even number of grid steps so the
    # "parallel" batch axis splits evenly across both TensorCores.
    in_isz = jnp.dtype(cd).itemsize
    out_isz = jnp.dtype(out_dtype).itemsize
    n_streams = 1 if fuse_pe else 2
    if batch_block is None:
        per_elem = (n_streams * 2 * n_pad * d * in_isz        # streamed inputs (x2 buf)
                    + 2 * (s * d + s * n_pad) * out_isz       # outputs (x2 buf)
                    + (2 * n_pad * d + 3 * s * n_pad) * 4)    # live f32 intermediates
        fixed = 2 * ((2 * d * d + s * d + n_pad * d) * in_isz + (2 * d + s) * 4)
        usable = max(vmem_budget_bytes - fixed, per_elem)
        batch_block = int(usable // per_elem)
    tb = int(max(1, min(batch_block, b)))
    nblocks = pl.cdiv(b, tb)
    bp = nblocks * tb

    if bp != b or n_pad != n:
        pad3 = ((0, bp - b), (0, n_pad - n), (0, 0))
        inputs = jnp.pad(inputs, pad3)
        if not fuse_pe:
            inputs_pe = jnp.pad(inputs_pe, pad3)
    if fuse_pe and n_pad != n:
        pe = jnp.pad(pe, ((0, n_pad - n), (0, 0)))

    rep = lambda shape: pl.BlockSpec(shape, lambda i: (0,) * len(shape))
    per_batch = lambda shape: pl.BlockSpec(shape, lambda i: (i, 0, 0))

    in_specs = [rep((d, d)), rep((1, d)),          # to_k linear 1
                rep((d, d)), rep((1, d)),          # to_k linear 2
                rep((s, d)), rep((s, 1))]          # fused linear3 (x) slots
    args = [w1, b1, w2, b2, slots_w3_c, c3]
    if fuse_pe:
        in_specs.append(rep((n_pad, d)))           # shared positional embedding
        args.append(pe)
    else:
        in_specs.append(per_batch((tb, n_pad, d)))  # inputs_pe stream
        args.append(inputs_pe)
    in_specs.append(per_batch((tb, n_pad, d)))      # inputs (values) stream
    args.append(inputs)

    kernel = functools.partial(_scouter_kernel, scale=scale, eps=eps,
                               n_valid=n, fuse_pe=fuse_pe, compute_dtype=cd)
    updates, attn = pl.pallas_call(
        kernel,
        out_shape=(jax.ShapeDtypeStruct((bp, s, d), out_dtype),
                   jax.ShapeDtypeStruct((bp, s, n_pad), out_dtype)),
        grid=(nblocks,),
        in_specs=in_specs,
        out_specs=(per_batch((tb, s, d)), per_batch((tb, s, n_pad))),
        compiler_params=pltpu.CompilerParams(
            dimension_semantics=("parallel",),
            vmem_limit_bytes=int(vmem_budget_bytes)),
        # NOTE: the grid-invariant weight blocks could additionally be
        # single-buffered (pipeline_mode=pl.Buffered(1)) to reclaim VMEM for a
        # larger tb / deeper input buffering on v7x; left at defaults here for
        # portability across jax versions.
    )(*args)

    return updates[:b], attn[:b, :, :n]


def _reference(inputs_pe, inputs, slots0, to_k_params, eps=1e-8):
    """Pure-JAX reference mirroring the PyTorch forward."""
    b, n, d = inputs_pe.shape
    scale = float(d) ** (-0.5)
    (w1, b1), (w2, b2), (w3, b3) = to_k_params
    h = jnp.maximum(inputs_pe @ w1 + b1.reshape(1, d), 0.0)
    h = jnp.maximum(h @ w2 + b2.reshape(1, d), 0.0)
    k = h @ w3 + b3.reshape(1, d)
    q = jnp.broadcast_to(slots0[None], (b,) + slots0.shape)
    dots = jnp.einsum('bid,bjd->bij', q, k) * scale
    scale_fct = dots.sum(axis=(1, 2))[:, None, None]
    dots = dots / dots.sum(axis=2, keepdims=True) * scale_fct
    attn = jax.nn.sigmoid(dots)
    attn2 = attn / (attn.sum(axis=-1, keepdims=True) + eps)
    updates = jnp.einsum('bjd,bij->bid', inputs, attn2)
    return updates, attn


if __name__ == "__main__":
    B, N, D, NUM_CONCEPT = 4, 16, 32, 8

    key = jax.random.PRNGKey(0)
    (k_pe, k_in, k_mu, k_sig, k_slot,
     kw1, kb1, kw2, kb2, kw3, kb3, k_pos) = jax.random.split(key, 12)

    inputs_pe = jax.random.normal(k_pe, (B, N, D), dtype=jnp.float32)
    inputs = jax.random.normal(k_in, (B, N, D), dtype=jnp.float32)

    # initial_slots ~ Normal(mu, sigma) with mu, |sigma| ~ randn(1,1,D)
    slots_mu = jax.random.normal(k_mu, (1, 1, D), dtype=jnp.float32)
    slots_sigma = jnp.abs(jax.random.normal(k_sig, (1, 1, D), dtype=jnp.float32))
    initial_slots = (slots_mu + slots_sigma *
                     jax.random.normal(k_slot, (1, NUM_CONCEPT, D),
                                       dtype=jnp.float32))[0]        # (S, D)

    def lin_init(kw, kb):
        bound = 1.0 / np.sqrt(D)
        w = jax.random.uniform(kw, (D, D), jnp.float32, -bound, bound)
        bias = jax.random.uniform(kb, (1, D), jnp.float32, -bound, bound)
        return w, bias

    to_k_params = (lin_init(kw1, kb1), lin_init(kw2, kb2), lin_init(kw3, kb3))

    # 1) Default path: both (b, n, d) streams, f32, VMEM-budgeted batch tile.
    updates, attn = scouter_attention(inputs_pe, inputs, initial_slots,
                                      to_k_params)
    jax.block_until_ready((updates, attn))
    upd_ref, attn_ref = _reference(inputs_pe, inputs, initial_slots, to_k_params)
    np.testing.assert_allclose(np.asarray(updates), np.asarray(upd_ref),
                               rtol=1e-5, atol=1e-5)
    np.testing.assert_allclose(np.asarray(attn), np.asarray(attn_ref),
                               rtol=1e-5, atol=1e-5)

    # 2) Ragged batch with an explicit small batch tile (exercises batch
    #    padding and a multi-step "parallel" grid: b=3, tb=2 -> pad to 4).
    upd3, attn3 = scouter_attention(inputs_pe[:3], inputs[:3], initial_slots,
                                    to_k_params, batch_block=2)
    jax.block_until_ready((upd3, attn3))
    upd3_ref, attn3_ref = _reference(inputs_pe[:3], inputs[:3], initial_slots,
                                     to_k_params)
    np.testing.assert_allclose(np.asarray(upd3), np.asarray(upd3_ref),
                               rtol=1e-5, atol=1e-5)
    np.testing.assert_allclose(np.asarray(attn3), np.asarray(attn3_ref),
                               rtol=1e-5, atol=1e-5)

    # 3) Fused positional-embedding path: inputs_pe = inputs + pos_embed is
    #    formed in-kernel, so only one (b, n, d) array is streamed from HBM.
    pos_embed = jax.random.normal(k_pos, (N, D), dtype=jnp.float32)
    inputs_pe_f = inputs + pos_embed[None]
    updf, attnf = scouter_attention(None, inputs, initial_slots, to_k_params,
                                    pos_embed=pos_embed)
    jax.block_until_ready((updf, attnf))
    updf_ref, attnf_ref = _reference(inputs_pe_f, inputs, initial_slots,
                                     to_k_params)
    np.testing.assert_allclose(np.asarray(updf), np.asarray(updf_ref),
                               rtol=1e-5, atol=1e-5)
    np.testing.assert_allclose(np.asarray(attnf), np.asarray(attnf_ref),
                               rtol=1e-5, atol=1e-5)

    print("KERNEL_OK")
</pallas_src>

<mosaic_0001>
module attributes {stable_mosaic.version = 11 : i64} {
  func.func @_scouter_kernel(%arg0: i32, %arg1: memref<32x32xf32, #tpu.memory_space<vmem>>, %arg2: memref<1x32xf32, #tpu.memory_space<vmem>>, %arg3: memref<32x32xf32, #tpu.memory_space<vmem>>, %arg4: memref<1x32xf32, #tpu.memory_space<vmem>>, %arg5: memref<8x32xf32, #tpu.memory_space<vmem>>, %arg6: memref<8x1xf32, #tpu.memory_space<vmem>>, %arg7: memref<4x128x32xf32, #tpu.memory_space<vmem>>, %arg8: memref<4x128x32xf32, #tpu.memory_space<vmem>>, %arg9: memref<4x8x32xf32, #tpu.memory_space<vmem>>, %arg10: memref<4x8x128xf32, #tpu.memory_space<vmem>>) attributes {dimension_semantics = [#tpu.dimension_semantics<parallel>], iteration_bounds = array<i64: 1>, scalar_prefetch = 0 : i64, scratch_operands = 0 : i64, tpu.core_type = #tpu.core_type<tc>, window_params = [{pipeline_mode = #tpu.pipeline_mode<synchronous>, transform_indices = @transform_0, window_bounds = array<i64: 32, 32>}, {pipeline_mode = #tpu.pipeline_mode<synchronous>, transform_indices = @transform_1, window_bounds = array<i64: 1, 32>}, {pipeline_mode = #tpu.pipeline_mode<synchronous>, transform_indices = @transform_2, window_bounds = array<i64: 32, 32>}, {pipeline_mode = #tpu.pipeline_mode<synchronous>, transform_indices = @transform_3, window_bounds = array<i64: 1, 32>}, {pipeline_mode = #tpu.pipeline_mode<synchronous>, transform_indices = @transform_4, window_bounds = array<i64: 8, 32>}, {pipeline_mode = #tpu.pipeline_mode<synchronous>, transform_indices = @transform_5, window_bounds = array<i64: 8, 1>}, {transform_indices = @transform_6, window_bounds = array<i64: 4, 128, 32>}, {transform_indices = @transform_7, window_bounds = array<i64: 4, 128, 32>}, {transform_indices = @transform_8, window_bounds = array<i64: 4, 8, 32>}, {transform_indices = @transform_9, window_bounds = array<i64: 4, 8, 128>}]} {
    %c0 = arith.constant 0 : index
    %c0_0 = arith.constant 0 : index
    %c0_1 = arith.constant 0 : index
    %0 = vector.load %arg8[%c0, %c0_0, %c0_1] : memref<4x128x32xf32, #tpu.memory_space<vmem>>, vector<4x128x32xf32>
    %c0_2 = arith.constant 0 : index
    %c0_3 = arith.constant 0 : index
    %c0_4 = arith.constant 0 : index
    %1 = vector.load %arg7[%c0_2, %c0_3, %c0_4] : memref<4x128x32xf32, #tpu.memory_space<vmem>>, vector<4x128x32xf32>
    %2 = vector.shape_cast %1 : vector<4x128x32xf32> to vector<512x32xf32>
    %c0_5 = arith.constant 0 : index
    %c0_6 = arith.constant 0 : index
    %3 = vector.load %arg1[%c0_5, %c0_6] : memref<32x32xf32, #tpu.memory_space<vmem>>, vector<32x32xf32>
    %cst = arith.constant dense<0.000000e+00> : vector<512x32xf32>
    %4 = tpu.matmul %2, %3, %cst {dimension_numbers = #tpu.dot_dimension_numbers<[1], [0], [0], [1], [0, 0, 1, 1], [], []>} : vector<512x32xf32>, vector<32x32xf32>, vector<512x32xf32> -> vector<512x32xf32>
    %c0_7 = arith.constant 0 : index
    %c0_8 = arith.constant 0 : index
    %5 = vector.load %arg2[%c0_7, %c0_8] : memref<1x32xf32, #tpu.memory_space<vmem>>, vector<1x32xf32>
    %6 = vector.broadcast %5 : vector<1x32xf32> to vector<512x32xf32>
    %7 = arith.addf %4, %6 : vector<512x32xf32>
    %cst_9 = arith.constant 0.000000e+00 : f32
    %8 = vector.broadcast %cst_9 : f32 to vector<512x32xf32>
    %9 = arith.maximumf %7, %8 : vector<512x32xf32>
    %c0_10 = arith.constant 0 : index
    %c0_11 = arith.constant 0 : index
    %10 = vector.load %arg3[%c0_10, %c0_11] : memref<32x32xf32, #tpu.memory_space<vmem>>, vector<32x32xf32>
    %cst_12 = arith.constant dense<0.000000e+00> : vector<512x32xf32>
    %11 = tpu.matmul %9, %10, %cst_12 {dimension_numbers = #tpu.dot_dimension_numbers<[1], [0], [0], [1], [0, 0, 1, 1], [], []>} : vector<512x32xf32>, vector<32x32xf32>, vector<512x32xf32> -> vector<512x32xf32>
    %c0_13 = arith.constant 0 : index
    %c0_14 = arith.constant 0 : index
    %12 = vector.load %arg4[%c0_13, %c0_14] : memref<1x32xf32, #tpu.memory_space<vmem>>, vector<1x32xf32>
    %13 = vector.broadcast %12 : vector<1x32xf32> to vector<512x32xf32>
    %14 = arith.addf %11, %13 : vector<512x32xf32>
    %cst_15 = arith.constant 0.000000e+00 : f32
    %15 = vector.broadcast %cst_15 : f32 to vector<512x32xf32>
    %16 = arith.maximumf %14, %15 : vector<512x32xf32>
    %17 = vector.shape_cast %16 : vector<512x32xf32> to vector<4x128x32xf32>
    %c0_16 = arith.constant 0 : index
    %c0_17 = arith.constant 0 : index
    %18 = vector.load %arg5[%c0_16, %c0_17] : memref<8x32xf32, #tpu.memory_space<vmem>>, vector<8x32xf32>
    %19 = vector.shape_cast %18 : vector<8x32xf32> to vector<1x8x32xf32>
    %20 = vector.shape_cast %19 : vector<1x8x32xf32> to vector<1x8x32xf32>
    %21 = vector.broadcast %20 : vector<1x8x32xf32> to vector<4x8x32xf32>
    "tpu.trace_start"() <{level = 10 : i32, message = "bsd,bnd->bsn"}> : () -> ()
    %cst_18 = arith.constant dense<0.000000e+00> : vector<4x8x128xf32>
    %22 = tpu.matmul %21, %17, %cst_18 {dimension_numbers = #tpu.dot_dimension_numbers<[2], [2], [1], [1], [0, 0, 0, 1, 1, 1], [0], [0]>} : vector<4x8x32xf32>, vector<4x128x32xf32>, vector<4x8x128xf32> -> vector<4x8x128xf32>
    "tpu.trace_stop"() : () -> ()
    %c0_19 = arith.constant 0 : index
    %c0_20 = arith.constant 0 : index
    %23 = vector.load %arg6[%c0_19, %c0_20] : memref<8x1xf32, #tpu.memory_space<vmem>>, vector<8x1xf32>
    %24 = vector.shape_cast %23 : vector<8x1xf32> to vector<1x8x1xf32>
    %25 = vector.broadcast %24 : vector<1x8x1xf32> to vector<4x8x128xf32>
    %26 = arith.addf %22, %25 : vector<4x8x128xf32>
    %27 = tpu.iota {dimensions = array<i32: 2>} : vector<4x8x128xi32>
    %c16_i32 = arith.constant 16 : i32
    %28 = vector.broadcast %c16_i32 : i32 to vector<4x8x128xi32>
    %29 = arith.cmpi slt, %27, %28 : vector<4x8x128xi32>
    %cst_21 = arith.constant 0.000000e+00 : f32
    %30 = vector.broadcast %cst_21 : f32 to vector<4x8x128xf32>
    %31 = arith.select %29, %26, %30 : vector<4x8x128xi1>, vector<4x8x128xf32>
    %cst_22 = arith.constant dense<0.000000e+00> : vector<4x8xf32>
    %32 = vector.multi_reduction <add>, %31, %cst_22 [2] : vector<4x8x128xf32> to vector<4x8xf32>
    %33 = vector.shape_cast %32 : vector<4x8xf32> to vector<4x8x1xf32>
    %cst_23 = arith.constant dense<0.000000e+00> : vector<4x1xf32>
    %34 = vector.multi_reduction <add>, %33, %cst_23 [1] : vector<4x8x1xf32> to vector<4x1xf32>
    %35 = vector.shape_cast %34 : vector<4x1xf32> to vector<4x1x1xf32>
    %cst_24 = arith.constant 0.000000e+00 : f32
    %36 = vector.broadcast %cst_24 : f32 to vector<4x8x1xf32>
    %37 = arith.cmpf oeq, %33, %36 : vector<4x8x1xf32>
    %cst_25 = arith.constant 1.000000e+00 : f32
    %38 = vector.broadcast %cst_25 : f32 to vector<4x8x1xf32>
    %39 = arith.select %37, %38, %33 : vector<4x8x1xi1>, vector<4x8x1xf32>
    %cst_26 = arith.constant 0.176776692 : f32
    %40 = vector.broadcast %cst_26 : f32 to vector<4x1x1xf32>
    %41 = arith.mulf %35, %40 : vector<4x1x1xf32>
    %42 = vector.broadcast %41 : vector<4x1x1xf32> to vector<4x8x1xf32>
    %43 = arith.divf %42, %39 : vector<4x8x1xf32>
    %44 = vector.broadcast %43 : vector<4x8x1xf32> to vector<4x8x128xf32>
    %45 = arith.mulf %31, %44 : vector<4x8x128xf32>
    %46 = arith.negf %45 : vector<4x8x128xf32>
    %47 = math.exp %46 : vector<4x8x128xf32>
    %cst_27 = arith.constant 1.000000e+00 : f32
    %48 = vector.broadcast %cst_27 : f32 to vector<4x8x128xf32>
    %49 = arith.addf %48, %47 : vector<4x8x128xf32>
    %50 = arith.divf %48, %49 : vector<4x8x128xf32>
    %cst_28 = arith.constant 0.000000e+00 : f32
    %51 = vector.broadcast %cst_28 : f32 to vector<4x8x128xf32>
    %52 = arith.select %29, %50, %51 : vector<4x8x128xi1>, vector<4x8x128xf32>
    %cst_29 = arith.constant dense<0.000000e+00> : vector<4x8xf32>
    %53 = vector.multi_reduction <add>, %52, %cst_29 [2] : vector<4x8x128xf32> to vector<4x8xf32>
    %54 = vector.shape_cast %53 : vector<4x8xf32> to vector<4x8x1xf32>
    %cst_30 = arith.constant 9.99999993E-9 : f32
    %55 = vector.broadcast %cst_30 : f32 to vector<4x8x1xf32>
    %56 = arith.addf %54, %55 : vector<4x8x1xf32>
    %cst_31 = arith.constant 1.000000e+00 : f32
    %57 = vector.broadcast %cst_31 : f32 to vector<4x8x1xf32>
    %58 = arith.divf %57, %56 : vector<4x8x1xf32>
    %59 = vector.broadcast %58 : vector<4x8x1xf32> to vector<4x8x128xf32>
    %60 = arith.mulf %52, %59 : vector<4x8x128xf32>
    "tpu.trace_start"() <{level = 10 : i32, message = "bsn,bnd->bsd"}> : () -> ()
    %cst_32 = arith.constant dense<0.000000e+00> : vector<4x8x32xf32>
    %61 = tpu.matmul %60, %0, %cst_32 {dimension_numbers = #tpu.dot_dimension_numbers<[2], [1], [1], [2], [0, 0, 0, 1, 1, 2], [0], [0]>} : vector<4x8x128xf32>, vector<4x128x32xf32>, vector<4x8x32xf32> -> vector<4x8x32xf32>
    "tpu.trace_stop"() : () -> ()
    %c0_33 = arith.constant 0 : index
    %c0_34 = arith.constant 0 : index
    %c0_35 = arith.constant 0 : index
    %62 = vector.load %arg9[%c0_33, %c0_34, %c0_35] : memref<4x8x32xf32, #tpu.memory_space<vmem>>, vector<4x8x32xf32>
    tpu.vector_store %arg9[%c0_33, %c0_34, %c0_35], %61 {strides = array<i32>} : memref<4x8x32xf32, #tpu.memory_space<vmem>>, vector<4x8x32xf32>,
    %c0_36 = arith.constant 0 : index
    %c0_37 = arith.constant 0 : index
    %c0_38 = arith.constant 0 : index
    %63 = vector.load %arg10[%c0_36, %c0_37, %c0_38] : memref<4x8x128xf32, #tpu.memory_space<vmem>>, vector<4x8x128xf32>
    tpu.vector_store %arg10[%c0_36, %c0_37, %c0_38], %52 {strides = array<i32>} : memref<4x8x128xf32, #tpu.memory_space<vmem>>, vector<4x8x128xf32>,
    return
  }
  func.func @transform_0(%arg0: i32) -> (i32, i32) {
    %c0_i32 = arith.constant 0 : i32
    %c0_i32_0 = arith.constant 0 : i32
    %c0_i32_1 = arith.constant 0 : i32
    return %c0_i32, %c0_i32_0 : i32, i32
  }
  func.func @transform_1(%arg0: i32) -> (i32, i32) {
    %c0_i32 = arith.constant 0 : i32
    %c0_i32_0 = arith.constant 0 : i32
    %c0_i32_1 = arith.constant 0 : i32
    return %c0_i32, %c0_i32_0 : i32, i32
  }
  func.func @transform_2(%arg0: i32) -> (i32, i32) {
    %c0_i32 = arith.constant 0 : i32
    %c0_i32_0 = arith.constant 0 : i32
    %c0_i32_1 = arith.constant 0 : i32
    return %c0_i32, %c0_i32_0 : i32, i32
  }
  func.func @transform_3(%arg0: i32) -> (i32, i32) {
    %c0_i32 = arith.constant 0 : i32
    %c0_i32_0 = arith.constant 0 : i32
    %c0_i32_1 = arith.constant 0 : i32
    return %c0_i32, %c0_i32_0 : i32, i32
  }
  func.func @transform_4(%arg0: i32) -> (i32, i32) {
    %c0_i32 = arith.constant 0 : i32
    %c0_i32_0 = arith.constant 0 : i32
    %c0_i32_1 = arith.constant 0 : i32
    return %c0_i32, %c0_i32_0 : i32, i32
  }
  func.func @transform_5(%arg0: i32) -> (i32, i32) {
    %c0_i32 = arith.constant 0 : i32
    %c0_i32_0 = arith.constant 0 : i32
    %c0_i32_1 = arith.constant 0 : i32
    return %c0_i32, %c0_i32_0 : i32, i32
  }
  func.func @transform_6(%arg0: i32) -> (i32, i32, i32) {
    %c0_i32 = arith.constant 0 : i32
    %c0_i32_0 = arith.constant 0 : i32
    %c0_i32_1 = arith.constant 0 : i32
    return %arg0, %c0_i32, %c0_i32_0 : i32, i32, i32
  }
  func.func @transform_7(%arg0: i32) -> (i32, i32, i32) {
    %c0_i32 = arith.constant 0 : i32
    %c0_i32_0 = arith.constant 0 : i32
    %c0_i32_1 = arith.constant 0 : i32
    return %arg0, %c0_i32, %c0_i32_0 : i32, i32, i32
  }
  func.func @transform_8(%arg0: i32) -> (i32, i32, i32) {
    %c0_i32 = arith.constant 0 : i32
    %c0_i32_0 = arith.constant 0 : i32
    %c0_i32_1 = arith.constant 0 : i32
    return %arg0, %c0_i32, %c0_i32_0 : i32, i32, i32
  }
  func.func @transform_9(%arg0: i32) -> (i32, i32, i32) {
    %c0_i32 = arith.constant 0 : i32
    %c0_i32_0 = arith.constant 0 : i32
    %c0_i32_1 = arith.constant 0 : i32
    return %arg0, %c0_i32, %c0_i32_0 : i32, i32, i32
  }
}

</mosaic_0001>

<llo_original>
// kernel: tpu_custom_call.1
$region0: #{tpu_custom_call.1}
  #allocation0 [shape = 'u32[]', space=smem, size = 0x4, offset = 0x4, fixed_abs, tag = 'smem constant byte address 0x4 - core index']
  #allocation1 [shape = 'u32[144,128]{1,0:T(1,128)}', space=vmem, size = 0x12000, scoped, tag = 'internal scratch']
  %s0 = inlined_call_operand.vmem [shape: f32[32,32], index: 0, kind: input, shape index: {}]
  %s1 = inlined_call_operand.vmem [shape: f32[1,32], index: 1, kind: input, shape index: {}]
  %s2 = inlined_call_operand.vmem [shape: f32[32,32], index: 2, kind: input, shape index: {}]
  %s3 = inlined_call_operand.vmem [shape: f32[1,32], index: 3, kind: input, shape index: {}]
  %s4 = inlined_call_operand.vmem [shape: f32[8,32], index: 4, kind: input, shape index: {}]
  %s5 = inlined_call_operand.vmem [shape: f32[8,1], index: 5, kind: input, shape index: {}]
  %s6 = inlined_call_operand.vmem [shape: f32[4,128,32], index: 6, kind: input, shape index: {}]
  %s7 = inlined_call_operand.vmem [shape: f32[4,128,32], index: 7, kind: input, shape index: {}]
  %s8 = inlined_call_operand.hbm [shape: f32[4,8,32], index: 8, kind: output, shape index: {0}]
  %s9 = inlined_call_operand.hbm [shape: f32[4,8,128], index: 9, kind: output, shape index: {1}]
  %10 = xla_tuple %s8, %s9
  %s11 = sld [smem:[#allocation0]]
  $region50: #{tpu_custom_call.1} parent=0
    _
  %s13 = ssub.s32 1, %s11
  %s14 = scalar_select 0, %s13, %s11
  $region1: #{tpu_custom_call.1} parent=0
    #allocation2 [shape = 'u8[16384]{0}', space=vmem, size = 0x4000, scoped, tag = 'output window, operand 0, single buffered']
    #allocation3 [shape = 's32[1]{0}', space=sflag, size = 0x4, scoped, tag = 'scoped memory for tpu_custom_call.1']
    #allocation4 [shape = 'u8[16384]{0}', space=vmem, size = 0x4000, scoped, tag = 'output window, operand 1, single buffered']
    #allocation5 [shape = 's32[1]{0}', space=sflag, size = 0x4, scoped, tag = 'scoped memory for tpu_custom_call.1']
    %15 = vsyncpa [#allocation3], 0
    %16 = vsyncpa [#allocation5], 0
    // Predicated region
    $region2: #{tpu_custom_call.1} parent=1 // pred_check
      _
    $region3: #{tpu_custom_call.1} parent=1 // pred_check_branch
      %18 = sbr.rel (0) target = $region5
    $region4: #{tpu_custom_call.1} parent=1 // pred_region
      _
    $region5: #{tpu_custom_call.1} parent=1 // pred_fallthru
      _
    // Predicated region
    $region6: #{tpu_custom_call.1} parent=1 // pred_check
      _
    $region7: #{tpu_custom_call.1} parent=1 // pred_check_branch
      %20 = sbr.rel (0) target = $region9
    $region8: #{tpu_custom_call.1} parent=1 // pred_region
      _
    $region9: #{tpu_custom_call.1} parent=1 // pred_fallthru
      _
    // Predicated region
    $region10: #{tpu_custom_call.1} parent=1 // pred_check
      _
    $region11: #{tpu_custom_call.1} parent=1 // pred_check_branch
      %22 = sbr.rel (0) target = $region13
    $region12: #{tpu_custom_call.1} parent=1 // pred_region
      _
    $region13: #{tpu_custom_call.1} parent=1 // pred_fallthru
      _
    // Predicated region
    $region14: #{tpu_custom_call.1} parent=1 // pred_check
      _
    $region15: #{tpu_custom_call.1} parent=1 // pred_check_branch
      %24 = sbr.rel (0) target = $region17
    $region16: #{tpu_custom_call.1} parent=1 // pred_region
      _
    $region17: #{tpu_custom_call.1} parent=1 // pred_fallthru
      _
    // Predicated region
    $region18: #{tpu_custom_call.1} parent=1 // pred_check
      _
    $region19: #{tpu_custom_call.1} parent=1 // pred_check_branch
      %26 = sbr.rel (0) target = $region21
    $region20: #{tpu_custom_call.1} parent=1 // pred_region
      _
    $region21: #{tpu_custom_call.1} parent=1 // pred_fallthru
      _
    // Predicated region
    $region22: #{tpu_custom_call.1} parent=1 // pred_check
      _
    $region23: #{tpu_custom_call.1} parent=1 // pred_check_branch
      %28 = sbr.rel (0) target = $region25
    $region24: #{tpu_custom_call.1} parent=1 // pred_region
      _
    $region25: #{tpu_custom_call.1} parent=1 // pred_fallthru
      _
    // Predicated region
    $region26: #{tpu_custom_call.1} parent=1 // pred_check
      _
    $region27: #{tpu_custom_call.1} parent=1 // pred_check_branch
      %30 = sbr.rel (0) target = $region29
    $region28: #{tpu_custom_call.1} parent=1 // pred_region
      _
    $region29: #{tpu_custom_call.1} parent=1 // pred_fallthru
      _
    // Predicated region
    $region30: #{tpu_custom_call.1} parent=1 // pred_check
      _
    $region31: #{tpu_custom_call.1} parent=1 // pred_check_branch
      %32 = sbr.rel (0) target = $region33
    $region32: #{tpu_custom_call.1} parent=1 // pred_region
      _
    $region33: #{tpu_custom_call.1} parent=1 // pred_fallthru
      _
    %v33 = vld [vmem:[%s7] sm:$0xff]
    %v34 = vld [vmem:[%s7 + $0x8] sm:$0xff]
    %v35 = vld [vmem:[%s7 + $0x10] sm:$0xff]
    %v36 = vld [vmem:[%s7 + $0x18] sm:$0xff]
    %v37 = vld [vmem:[%s7 + $0x20] sm:$0xff]
    %v38 = vld [vmem:[%s7 + $0x28] sm:$0xff]
    %v39 = vld [vmem:[%s7 + $0x30] sm:$0xff]
    %v40 = vld [vmem:[%s7 + $0x38] sm:$0xff]
    %v41 = vld [vmem:[%s7 + $0x40] sm:$0xff]
    %v42 = vld [vmem:[%s7 + $0x48] sm:$0xff]
    %v43 = vld [vmem:[%s7 + $0x50] sm:$0xff]
    %v44 = vld [vmem:[%s7 + $0x58] sm:$0xff]
    %v45 = vld [vmem:[%s7 + $0x60] sm:$0xff]
    %v46 = vld [vmem:[%s7 + $0x68] sm:$0xff]
    %v47 = vld [vmem:[%s7 + $0x70] sm:$0xff]
    %v48 = vld [vmem:[%s7 + $0x78] sm:$0xff]
    %v49 = vld [vmem:[%s7 + $0x80] sm:$0xff]
    %v50 = vld [vmem:[%s7 + $0x88] sm:$0xff]
    %v51 = vld [vmem:[%s7 + $0x90] sm:$0xff]
    %v52 = vld [vmem:[%s7 + $0x98] sm:$0xff]
    %v53 = vld [vmem:[%s7 + $0xa0] sm:$0xff]
    %v54 = vld [vmem:[%s7 + $0xa8] sm:$0xff]
    %v55 = vld [vmem:[%s7 + $0xb0] sm:$0xff]
    %v56 = vld [vmem:[%s7 + $0xb8] sm:$0xff]
    %v57 = vld [vmem:[%s7 + $0xc0] sm:$0xff]
    %v58 = vld [vmem:[%s7 + $0xc8] sm:$0xff]
    %v59 = vld [vmem:[%s7 + $0xd0] sm:$0xff]
    %v60 = vld [vmem:[%s7 + $0xd8] sm:$0xff]
    %v61 = vld [vmem:[%s7 + $0xe0] sm:$0xff]
    %v62 = vld [vmem:[%s7 + $0xe8] sm:$0xff]
    %v63 = vld [vmem:[%s7 + $0xf0] sm:$0xff]
    %v64 = vld [vmem:[%s7 + $0xf8] sm:$0xff]
    %v65 = vld [vmem:[%s7 + $0x100] sm:$0xff]
    %v66 = vld [vmem:[%s7 + $0x108] sm:$0xff]
    %v67 = vld [vmem:[%s7 + $0x110] sm:$0xff]
    %v68 = vld [vmem:[%s7 + $0x118] sm:$0xff]
    %v69 = vld [vmem:[%s7 + $0x120] sm:$0xff]
    %v70 = vld [vmem:[%s7 + $0x128] sm:$0xff]
    %v71 = vld [vmem:[%s7 + $0x130] sm:$0xff]
    %v72 = vld [vmem:[%s7 + $0x138] sm:$0xff]
    %v73 = vld [vmem:[%s7 + $0x140] sm:$0xff]
    %v74 = vld [vmem:[%s7 + $0x148] sm:$0xff]
    %v75 = vld [vmem:[%s7 + $0x150] sm:$0xff]
    %v76 = vld [vmem:[%s7 + $0x158] sm:$0xff]
    %v77 = vld [vmem:[%s7 + $0x160] sm:$0xff]
    %v78 = vld [vmem:[%s7 + $0x168] sm:$0xff]
    %v79 = vld [vmem:[%s7 + $0x170] sm:$0xff]
    %v80 = vld [vmem:[%s7 + $0x178] sm:$0xff]
    %v81 = vld [vmem:[%s7 + $0x180] sm:$0xff]
    %v82 = vld [vmem:[%s7 + $0x188] sm:$0xff]
    %v83 = vld [vmem:[%s7 + $0x190] sm:$0xff]
    %v84 = vld [vmem:[%s7 + $0x198] sm:$0xff]
    %v85 = vld [vmem:[%s7 + $0x1a0] sm:$0xff]
    %v86 = vld [vmem:[%s7 + $0x1a8] sm:$0xff]
    %v87 = vld [vmem:[%s7 + $0x1b0] sm:$0xff]
    %v88 = vld [vmem:[%s7 + $0x1b8] sm:$0xff]
    %v89 = vld [vmem:[%s7 + $0x1c0] sm:$0xff]
    %v90 = vld [vmem:[%s7 + $0x1c8] sm:$0xff]
    %v91 = vld [vmem:[%s7 + $0x1d0] sm:$0xff]
    %v92 = vld [vmem:[%s7 + $0x1d8] sm:$0xff]
    %v93 = vld [vmem:[%s7 + $0x1e0] sm:$0xff]
    %v94 = vld [vmem:[%s7 + $0x1e8] sm:$0xff]
    %v95 = vld [vmem:[%s7 + $0x1f0] sm:$0xff]
    %v96 = vld [vmem:[%s7 + $0x1f8] sm:$0xff]
    %v97 = vld [vmem:[%s6] sm:$0xff]
    %v98 = vld [vmem:[%s6 + $0x8] sm:$0xff]
    %v99 = vld [vmem:[%s6 + $0x10] sm:$0xff]
    %v100 = vld [vmem:[%s6 + $0x18] sm:$0xff]
    %v101 = vld [vmem:[%s6 + $0x20] sm:$0xff]
    %v102 = vld [vmem:[%s6 + $0x28] sm:$0xff]
    %v103 = vld [vmem:[%s6 + $0x30] sm:$0xff]
    %v104 = vld [vmem:[%s6 + $0x38] sm:$0xff]
    %v105 = vld [vmem:[%s6 + $0x40] sm:$0xff]
    %v106 = vld [vmem:[%s6 + $0x48] sm:$0xff]
    %v107 = vld [vmem:[%s6 + $0x50] sm:$0xff]
    %v108 = vld [vmem:[%s6 + $0x58] sm:$0xff]
    %v109 = vld [vmem:[%s6 + $0x60] sm:$0xff]
    %v110 = vld [vmem:[%s6 + $0x68] sm:$0xff]
    %v111 = vld [vmem:[%s6 + $0x70] sm:$0xff]
    %v112 = vld [vmem:[%s6 + $0x78] sm:$0xff]
    %v113 = vld [vmem:[%s6 + $0x80] sm:$0xff]
    %v114 = vld [vmem:[%s6 + $0x88] sm:$0xff]
    %v115 = vld [vmem:[%s6 + $0x90] sm:$0xff]
    %v116 = vld [vmem:[%s6 + $0x98] sm:$0xff]
    %v117 = vld [vmem:[%s6 + $0xa0] sm:$0xff]
    %v118 = vld [vmem:[%s6 + $0xa8] sm:$0xff]
    %v119 = vld [vmem:[%s6 + $0xb0] sm:$0xff]
    %v120 = vld [vmem:[%s6 + $0xb8] sm:$0xff]
    %v121 = vld [vmem:[%s6 + $0xc0] sm:$0xff]
    %v122 = vld [vmem:[%s6 + $0xc8] sm:$0xff]
    %v123 = vld [vmem:[%s6 + $0xd0] sm:$0xff]
    %v124 = vld [vmem:[%s6 + $0xd8] sm:$0xff]
    %v125 = vld [vmem:[%s6 + $0xe0] sm:$0xff]
    %v126 = vld [vmem:[%s6 + $0xe8] sm:$0xff]
    %v127 = vld [vmem:[%s6 + $0xf0] sm:$0xff]
    %v128 = vld [vmem:[%s6 + $0xf8] sm:$0xff]
    %v129 = vld [vmem:[%s6 + $0x100] sm:$0xff]
    %v130 = vld [vmem:[%s6 + $0x108] sm:$0xff]
    %v131 = vld [vmem:[%s6 + $0x110] sm:$0xff]
    %v132 = vld [vmem:[%s6 + $0x118] sm:$0xff]
    %v133 = vld [vmem:[%s6 + $0x120] sm:$0xff]
    %v134 = vld [vmem:[%s6 + $0x128] sm:$0xff]
    %v135 = vld [vmem:[%s6 + $0x130] sm:$0xff]
    %v136 = vld [vmem:[%s6 + $0x138] sm:$0xff]
    %v137 = vld [vmem:[%s6 + $0x140] sm:$0xff]
    %v138 = vld [vmem:[%s6 + $0x148] sm:$0xff]
    %v139 = vld [vmem:[%s6 + $0x150] sm:$0xff]
    %v140 = vld [vmem:[%s6 + $0x158] sm:$0xff]
    %v141 = vld [vmem:[%s6 + $0x160] sm:$0xff]
    %v142 = vld [vmem:[%s6 + $0x168] sm:$0xff]
    %v143 = vld [vmem:[%s6 + $0x170] sm:$0xff]
    %v144 = vld [vmem:[%s6 + $0x178] sm:$0xff]
    %v145 = vld [vmem:[%s6 + $0x180] sm:$0xff]
    %v146 = vld [vmem:[%s6 + $0x188] sm:$0xff]
    %v147 = vld [vmem:[%s6 + $0x190] sm:$0xff]
    %v148 = vld [vmem:[%s6 + $0x198] sm:$0xff]
    %v149 = vld [vmem:[%s6 + $0x1a0] sm:$0xff]
    %v150 = vld [vmem:[%s6 + $0x1a8] sm:$0xff]
    %v151 = vld [vmem:[%s6 + $0x1b0] sm:$0xff]
    %v152 = vld [vmem:[%s6 + $0x1b8] sm:$0xff]
    %v153 = vld [vmem:[%s6 + $0x1c0] sm:$0xff]
    %v154 = vld [vmem:[%s6 + $0x1c8] sm:$0xff]
    %v155 = vld [vmem:[%s6 + $0x1d0] sm:$0xff]
    %v156 = vld [vmem:[%s6 + $0x1d8] sm:$0xff]
    %v157 = vld [vmem:[%s6 + $0x1e0] sm:$0xff]
    %v158 = vld [vmem:[%s6 + $0x1e8] sm:$0xff]
    %v159 = vld [vmem:[%s6 + $0x1f0] sm:$0xff]
    %v160 = vld [vmem:[%s6 + $0x1f8] sm:$0xff]
    %v161 = vld [vmem:[%s0] sm:$0xff]
    %v162 = vld [vmem:[%s0 + $0x8] sm:$0xff]
    %v163 = vld [vmem:[%s0 + $0x10] sm:$0xff]
    %v164 = vld [vmem:[%s0 + $0x18] sm:$0xff]
    %v165 = vld [vmem:[%s1] sm:$0x1]
    %v167 = vlaneseq
    %v168 = vshrl.u32 %v167, 7
    %v169 = vsub.s32 0, %v168
    %v170 = vrot.slane %v165, %v169
    %vm172 = vcmask 261120
    %v174 = vsel %vm172, %v97, 0
    %v177 = vsel %vm172, %v98, 0
    %v180 = vsel %vm172, %v99, 0
    %v183 = vsel %vm172, %v100, 0
    %v186 = vsel %vm172, %v101, 0
    %v189 = vsel %vm172, %v102, 0
    %v192 = vsel %vm172, %v103, 0
    %v195 = vsel %vm172, %v104, 0
    %v198 = vsel %vm172, %v105, 0
    %v201 = vsel %vm172, %v106, 0
    %v204 = vsel %vm172, %v107, 0
    %v207 = vsel %vm172, %v108, 0
    %v210 = vsel %vm172, %v109, 0
    %v213 = vsel %vm172, %v110, 0
    %v216 = vsel %vm172, %v111, 0
    %v219 = vsel %vm172, %v112, 0
    %v222 = vsel %vm172, %v113, 0
    %v225 = vsel %vm172, %v114, 0
    %v228 = vsel %vm172, %v115, 0
    %v231 = vsel %vm172, %v116, 0
    %v234 = vsel %vm172, %v117, 0
    %v237 = vsel %vm172, %v118, 0
    %v240 = vsel %vm172, %v119, 0
    %v243 = vsel %vm172, %v120, 0
    %v246 = vsel %vm172, %v121, 0
    %v249 = vsel %vm172, %v122, 0
    %v252 = vsel %vm172, %v123, 0
    %v255 = vsel %vm172, %v124, 0
    %v258 = vsel %vm172, %v125, 0
    %v261 = vsel %vm172, %v126, 0
    %v264 = vsel %vm172, %v127, 0
    %v267 = vsel %vm172, %v128, 0
    %v270 = vsel %vm172, %v129, 0
    %v273 = vsel %vm172, %v130, 0
    %v276 = vsel %vm172, %v131, 0
    %v279 = vsel %vm172, %v132, 0
    %v282 = vsel %vm172, %v133, 0
    %v285 = vsel %vm172, %v134, 0
    %v288 = vsel %vm172, %v135, 0
    %v291 = vsel %vm172, %v136, 0
    %v294 = vsel %vm172, %v137, 0
    %v297 = vsel %vm172, %v138, 0
    %v300 = vsel %vm172, %v139, 0
    %v303 = vsel %vm172, %v140, 0
    %v306 = vsel %vm172, %v141, 0
    %v309 = vsel %vm172, %v142, 0
    %v312 = vsel %vm172, %v143, 0
    %v315 = vsel %vm172, %v144, 0
    %v318 = vsel %vm172, %v145, 0
    %v321 = vsel %vm172, %v146, 0
    %v324 = vsel %vm172, %v147, 0
    %v327 = vsel %vm172, %v148, 0
    %v330 = vsel %vm172, %v149, 0
    %v333 = vsel %vm172, %v150, 0
    %v336 = vsel %vm172, %v151, 0
    %v339 = vsel %vm172, %v152, 0
    %v342 = vsel %vm172, %v153, 0
    %v345 = vsel %vm172, %v154, 0
    %v348 = vsel %vm172, %v155, 0
    %v351 = vsel %vm172, %v156, 0
    %v354 = vsel %vm172, %v157, 0
    %v357 = vsel %vm172, %v158, 0
    %v360 = vsel %vm172, %v159, 0
    %v363 = vsel %vm172, %v160, 0
    %365 = vmatprep.subr.mxu0 0.0
    %366 = vmatpush1.msra.mxu0 %v161
    %367 = vmatprep.subr.mxu0 0.0
    %368 = vmatpush1.msra.mxu0 %v162
    %369 = vmatprep.subr.mxu0 0.0
    %370 = vmatpush1.msra.mxu0 %v163
    %371 = vmatprep.subr.mxu0 0.0
    %372 = vmatpush1.msra.mxu0 %v164
    %373 = vmatprep.subr.mxu0 0.0
    %374 = vmatpush1.msra.mxu0 0.0
    %375 = vmatprep.subr.mxu0 0.0
    %376 = vmatpush1.msra.mxu0 0.0
    %377 = vmatprep.subr.mxu0 0.0
    %378 = vmatpush1.msra.mxu0 0.0
    %379 = vmatprep.subr.mxu0 0.0
    %380 = vmatpush1.msra.mxu0 0.0
    %381 = vmatprep.subr.mxu0 0.0
    %382 = vmatpush1.msra.mxu0 0.0
    %383 = vmatprep.subr.mxu0 0.0
    %384 = vmatpush1.msra.mxu0 0.0
    %385 = vmatprep.subr.mxu0 0.0
    %386 = vmatpush1.msra.mxu0 0.0
    %387 = vmatprep.subr.mxu0 0.0
    %388 = vmatpush1.msra.mxu0 0.0
    %389 = vmatprep.subr.mxu0 0.0
    %390 = vmatpush1.msra.mxu0 0.0
    %391 = vmatprep.subr.mxu0 0.0
    %392 = vmatpush1.msra.mxu0 0.0
    %393 = vmatprep.subr.mxu0 0.0
    %394 = vmatpush1.msra.mxu0 0.0
    %395 = vmatprep.subr.mxu0 0.0
    %396 = vmatpush1.msra.mxu0 0.0
    %397 = vmatprep.subr.mxu0 0.0
    %398 = vmatpush1.msra.mxu0 0.0
    %399 = vmatprep.subr.mxu0 0.0
    %400 = vmatpush1.msra.mxu0 0.0
    %401 = vmatprep.subr.mxu0 0.0
    %402 = vmatpush1.msra.mxu0 0.0
    %403 = vmatprep.subr.mxu0 0.0
    %404 = vmatpush1.msra.mxu0 0.0
    %405 = vmatprep.subr.mxu0 0.0
    %406 = vmatpush1.msra.mxu0 0.0
    %407 = vmatprep.subr.mxu0 0.0
    %408 = vmatpush1.msra.mxu0 0.0
    %409 = vmatprep.subr.mxu0 0.0
    %410 = vmatpush1.msra.mxu0 0.0
    %411 = vmatprep.subr.mxu0 0.0
    %412 = vmatpush1.msra.mxu0 0.0
    %413 = vmatprep.subr.mxu0 0.0
    %414 = vmatpush1.msra.mxu0 0.0
    %415 = vmatprep.subr.mxu0 0.0
    %416 = vmatpush1.msra.mxu0 0.0
    %417 = vmatprep.subr.mxu0 0.0
    %418 = vmatpush1.msra.mxu0 0.0
    %419 = vmatprep.subr.mxu0 0.0
    %420 = vmatpush1.msra.mxu0 0.0
    %421 = vmatprep.subr.mxu0 0.0
    %422 = vmatpush1.msra.mxu0 0.0
    %423 = vmatprep.subr.mxu0 0.0
    %424 = vmatpush1.msra.mxu0 0.0
    %425 = vmatprep.subr.mxu0 0.0
    %426 = vmatpush1.msra.mxu0 0.0
    %427 = vmatprep.subr.mxu0 0.0
    %428 = vmatpush1.msra.mxu0 0.0
    %429 = vmatprep.mubr.f32.mxu0 0.0
    %430 = vmatmul.mubr.f32.gmra.mrb[0].mxu0 %v174
    %v431 = vpop.f32.mrb[0].mxu0
    %v432 = vadd.f32 %v170, %v431
    %v433 = vpop.f32.mrb[0].mxu0
    %434 = vmatprep.mubr.f32.mxu0 0.0
    %435 = vmatmul.mubr.f32.gmra.mrb[0].mxu0 %v177
    %v436 = vpop.f32.mrb[0].mxu0
    %v437 = vadd.f32 %v170, %v436
    %v438 = vpop.f32.mrb[0].mxu0
    %439 = vmatprep.mubr.f32.mxu0 0.0
    %440 = vmatmul.mubr.f32.gmra.mrb[0].mxu0 %v180
    %v441 = vpop.f32.mrb[0].mxu0
    %v442 = vadd.f32 %v170, %v441
    %v443 = vpop.f32.mrb[0].mxu0
    %444 = vmatprep.mubr.f32.mxu0 0.0
    %445 = vmatmul.mubr.f32.gmra.mrb[0].mxu0 %v183
    %v446 = vpop.f32.mrb[0].mxu0
    %v447 = vadd.f32 %v170, %v446
    %v448 = vpop.f32.mrb[0].mxu0
    %449 = vmatprep.mubr.f32.mxu0 0.0
    %450 = vmatmul.mubr.f32.gmra.mrb[0].mxu0 %v186
    %v451 = vpop.f32.mrb[0].mxu0
    %v452 = vadd.f32 %v170, %v451
    %v453 = vpop.f32.mrb[0].mxu0
    %454 = vmatprep.mubr.f32.mxu0 0.0
    %455 = vmatmul.mubr.f32.gmra.mrb[0].mxu0 %v189
    %v456 = vpop.f32.mrb[0].mxu0
    %v457 = vadd.f32 %v170, %v456
    %v458 = vpop.f32.mrb[0].mxu0
    %459 = vmatprep.mubr.f32.mxu0 0.0
    %460 = vmatmul.mubr.f32.gmra.mrb[0].mxu0 %v192
    %v461 = vpop.f32.mrb[0].mxu0
    %v462 = vadd.f32 %v170, %v461
    %v463 = vpop.f32.mrb[0].mxu0
    %464 = vmatprep.mubr.f32.mxu0 0.0
    %465 = vmatmul.mubr.f32.gmra.mrb[0].mxu0 %v195
    %v466 = vpop.f32.mrb[0].mxu0
    %v467 = vadd.f32 %v170, %v466
    %v468 = vpop.f32.mrb[0].mxu0
    %469 = vmatprep.mubr.f32.mxu0 0.0
    %470 = vmatmul.mubr.f32.gmra.mrb[0].mxu0 %v198
    %v471 = vpop.f32.mrb[0].mxu0
    %v472 = vadd.f32 %v170, %v471
    %v473 = vpop.f32.mrb[0].mxu0
    %474 = vmatprep.mubr.f32.mxu0 0.0
    %475 = vmatmul.mubr.f32.gmra.mrb[0].mxu0 %v201
    %v476 = vpop.f32.mrb[0].mxu0
    %v477 = vadd.f32 %v170, %v476
    %v478 = vpop.f32.mrb[0].mxu0
    %479 = vmatprep.mubr.f32.mxu0 0.0
    %480 = vmatmul.mubr.f32.gmra.mrb[0].mxu0 %v204
    %v481 = vpop.f32.mrb[0].mxu0
    %v482 = vadd.f32 %v170, %v481
    %v483 = vpop.f32.mrb[0].mxu0
    %484 = vmatprep.mubr.f32.mxu0 0.0
    %485 = vmatmul.mubr.f32.gmra.mrb[0].mxu0 %v207
    %v486 = vpop.f32.mrb[0].mxu0
    %v487 = vadd.f32 %v170, %v486
    %v488 = vpop.f32.mrb[0].mxu0
    %489 = vmatprep.mubr.f32.mxu0 0.0
    %490 = vmatmul.mubr.f32.gmra.mrb[0].mxu0 %v210
    %v491 = vpop.f32.mrb[0].mxu0
    %v492 = vadd.f32 %v170, %v491
    %v493 = vpop.f32.mrb[0].mxu0
    %494 = vmatprep.mubr.f32.mxu0 0.0
    %495 = vmatmul.mubr.f32.gmra.mrb[0].mxu0 %v213
    %v496 = vpop.f32.mrb[0].mxu0
    %v497 = vadd.f32 %v170, %v496
    %v498 = vpop.f32.mrb[0].mxu0
    %499 = vmatprep.mubr.f32.mxu0 0.0
    %500 = vmatmul.mubr.f32.gmra.mrb[0].mxu0 %v216
    %v501 = vpop.f32.mrb[0].mxu0
    %v502 = vadd.f32 %v170, %v501
    %v503 = vpop.f32.mrb[0].mxu0
    %504 = vmatprep.mubr.f32.mxu0 0.0
    %505 = vmatmul.mubr.f32.gmra.mrb[0].mxu0 %v219
    %v506 = vpop.f32.mrb[0].mxu0
    %v507 = vadd.f32 %v170, %v506
    %v508 = vpop.f32.mrb[0].mxu0
    %509 = vmatprep.mubr.f32.mxu0 0.0
    %510 = vmatmul.mubr.f32.gmra.mrb[0].mxu0 %v222
    %v511 = vpop.f32.mrb[0].mxu0
    %v512 = vadd.f32 %v170, %v511
    %v513 = vpop.f32.mrb[0].mxu0
    %514 = vmatprep.mubr.f32.mxu0 0.0
    %515 = vmatmul.mubr.f32.gmra.mrb[0].mxu0 %v225
    %v516 = vpop.f32.mrb[0].mxu0
    %v517 = vadd.f32 %v170, %v516
    %v518 = vpop.f32.mrb[0].mxu0
    %519 = vmatprep.mubr.f32.mxu0 0.0
    %520 = vmatmul.mubr.f32.gmra.mrb[0].mxu0 %v228
    %v521 = vpop.f32.mrb[0].mxu0
    %v522 = vadd.f32 %v170, %v521
    %v523 = vpop.f32.mrb[0].mxu0
    %524 = vmatprep.mubr.f32.mxu0 0.0
    %525 = vmatmul.mubr.f32.gmra.mrb[0].mxu0 %v231
    %v526 = vpop.f32.mrb[0].mxu0
    %v527 = vadd.f32 %v170, %v526
    %v528 = vpop.f32.mrb[0].mxu0
    %529 = vmatprep.mubr.f32.mxu0 0.0
    %530 = vmatmul.mubr.f32.gmra.mrb[0].mxu0 %v234
    %v531 = vpop.f32.mrb[0].mxu0
    %v532 = vadd.f32 %v170, %v531
    %v533 = vpop.f32.mrb[0].mxu0
    %534 = vmatprep.mubr.f32.mxu0 0.0
    %535 = vmatmul.mubr.f32.gmra.mrb[0].mxu0 %v237
    %v536 = vpop.f32.mrb[0].mxu0
    %v537 = vadd.f32 %v170, %v536
    %v538 = vpop.f32.mrb[0].mxu0
    %539 = vmatprep.mubr.f32.mxu0 0.0
    %540 = vmatmul.mubr.f32.gmra.mrb[0].mxu0 %v240
    %v541 = vpop.f32.mrb[0].mxu0
    %v542 = vadd.f32 %v170, %v541
    %v543 = vpop.f32.mrb[0].mxu0
    %544 = vmatprep.mubr.f32.mxu0 0.0
    %545 = vmatmul.mubr.f32.gmra.mrb[0].mxu0 %v243
    %v546 = vpop.f32.mrb[0].mxu0
    %v547 = vadd.f32 %v170, %v546
    %v548 = vpop.f32.mrb[0].mxu0
    %549 = vmatprep.mubr.f32.mxu0 0.0
    %550 = vmatmul.mubr.f32.gmra.mrb[0].mxu0 %v246
    %v551 = vpop.f32.mrb[0].mxu0
    %v552 = vadd.f32 %v170, %v551
    %v553 = vpop.f32.mrb[0].mxu0
    %554 = vmatprep.mubr.f32.mxu0 0.0
    %555 = vmatmul.mubr.f32.gmra.mrb[0].mxu0 %v249
    %v556 = vpop.f32.mrb[0].mxu0
    %v557 = vadd.f32 %v170, %v556
    %v558 = vpop.f32.mrb[0].mxu0
    %559 = vmatprep.mubr.f32.mxu0 0.0
    %560 = vmatmul.mubr.f32.gmra.mrb[0].mxu0 %v252
    %v561 = vpop.f32.mrb[0].mxu0
    %v562 = vadd.f32 %v170, %v561
    %v563 = vpop.f32.mrb[0].mxu0
    %564 = vmatprep.mubr.f32.mxu0 0.0
    %565 = vmatmul.mubr.f32.gmra.mrb[0].mxu0 %v255
    %v566 = vpop.f32.mrb[0].mxu0
    %v567 = vadd.f32 %v170, %v566
    %v568 = vpop.f32.mrb[0].mxu0
    %569 = vmatprep.mubr.f32.mxu0 0.0
    %570 = vmatmul.mubr.f32.gmra.mrb[0].mxu0 %v258
    %v571 = vpop.f32.mrb[0].mxu0
    %v572 = vadd.f32 %v170, %v571
    %v573 = vpop.f32.mrb[0].mxu0
    %574 = vmatprep.mubr.f32.mxu0 0.0
    %575 = vmatmul.mubr.f32.gmra.mrb[0].mxu0 %v261
    %v576 = vpop.f32.mrb[0].mxu0
    %v577 = vadd.f32 %v170, %v576
    %v578 = vpop.f32.mrb[0].mxu0
    %579 = vmatprep.mubr.f32.mxu0 0.0
    %580 = vmatmul.mubr.f32.gmra.mrb[0].mxu0 %v264
    %v581 = vpop.f32.mrb[0].mxu0
    %v582 = vadd.f32 %v170, %v581
    %v583 = vpop.f32.mrb[0].mxu0
    %584 = vmatprep.mubr.f32.mxu0 0.0
    %585 = vmatmul.mubr.f32.gmra.mrb[0].mxu0 %v267
    %v586 = vpop.f32.mrb[0].mxu0
    %v587 = vadd.f32 %v170, %v586
    %v588 = vpop.f32.mrb[0].mxu0
    %589 = vmatprep.mubr.f32.mxu0 0.0
    %590 = vmatmul.mubr.f32.gmra.mrb[0].mxu0 %v270
    %v591 = vpop.f32.mrb[0].mxu0
    %v592 = vadd.f32 %v170, %v591
    %v593 = vpop.f32.mrb[0].mxu0
    %594 = vmatprep.mubr.f32.mxu0 0.0
    %595 = vmatmul.mubr.f32.gmra.mrb[0].mxu0 %v273
    %v596 = vpop.f32.mrb[0].mxu0
    %v597 = vadd.f32 %v170, %v596
    %v598 = vpop.f32.mrb[0].mxu0
    %599 = vmatprep.mubr.f32.mxu0 0.0
    %600 = vmatmul.mubr.f32.gmra.mrb[0].mxu0 %v276
    %v601 = vpop.f32.mrb[0].mxu0
    %v602 = vadd.f32 %v170, %v601
    %v603 = vpop.f32.mrb[0].mxu0
    %604 = vmatprep.mubr.f32.mxu0 0.0
    %605 = vmatmul.mubr.f32.gmra.mrb[0].mxu0 %v279
    %v606 = vpop.f32.mrb[0].mxu0
    %v607 = vadd.f32 %v170, %v606
    %v608 = vpop.f32.mrb[0].mxu0
    %609 = vmatprep.mubr.f32.mxu0 0.0
    %610 = vmatmul.mubr.f32.gmra.mrb[0].mxu0 %v282
    %v611 = vpop.f32.mrb[0].mxu0
    %v612 = vadd.f32 %v170, %v611
    %v613 = vpop.f32.mrb[0].mxu0
    %614 = vmatprep.mubr.f32.mxu0 0.0
    %615 = vmatmul.mubr.f32.gmra.mrb[0].mxu0 %v285
    %v616 = vpop.f32.mrb[0].mxu0
    %v617 = vadd.f32 %v170, %v616
    %v618 = vpop.f32.mrb[0].mxu0
    %619 = vmatprep.mubr.f32.mxu0 0.0
    %620 = vmatmul.mubr.f32.gmra.mrb[0].mxu0 %v288
    %v621 = vpop.f32.mrb[0].mxu0
    %v622 = vadd.f32 %v170, %v621
    %v623 = vpop.f32.mrb[0].mxu0
    %624 = vmatprep.mubr.f32.mxu0 0.0
    %625 = vmatmul.mubr.f32.gmra.mrb[0].mxu0 %v291
    %v626 = vpop.f32.mrb[0].mxu0
    %v627 = vadd.f32 %v170, %v626
    %v628 = vpop.f32.mrb[0].mxu0
    %629 = vmatprep.mubr.f32.mxu0 0.0
    %630 = vmatmul.mubr.f32.gmra.mrb[0].mxu0 %v294
    %v631 = vpop.f32.mrb[0].mxu0
    %v632 = vadd.f32 %v170, %v631
    %v633 = vpop.f32.mrb[0].mxu0
    %634 = vmatprep.mubr.f32.mxu0 0.0
    %635 = vmatmul.mubr.f32.gmra.mrb[0].mxu0 %v297
    %v636 = vpop.f32.mrb[0].mxu0
    %v637 = vadd.f32 %v170, %v636
    %v638 = vpop.f32.mrb[0].mxu0
    %639 = vmatprep.mubr.f32.mxu0 0.0
    %640 = vmatmul.mubr.f32.gmra.mrb[0].mxu0 %v300
    %v641 = vpop.f32.mrb[0].mxu0
    %v642 = vadd.f32 %v170, %v641
    %v643 = vpop.f32.mrb[0].mxu0
    %644 = vmatprep.mubr.f32.mxu0 0.0
    %645 = vmatmul.mubr.f32.gmra.mrb[0].mxu0 %v303
    %v646 = vpop.f32.mrb[0].mxu0
    %v647 = vadd.f32 %v170, %v646
    %v648 = vpop.f32.mrb[0].mxu0
    %649 = vmatprep.mubr.f32.mxu0 0.0
    %650 = vmatmul.mubr.f32.gmra.mrb[0].mxu0 %v306
    %v651 = vpop.f32.mrb[0].mxu0
    %v652 = vadd.f32 %v170, %v651
    %v653 = vpop.f32.mrb[0].mxu0
    %654 = vmatprep.mubr.f32.mxu0 0.0
    %655 = vmatmul.mubr.f32.gmra.mrb[0].mxu0 %v309
    %v656 = vpop.f32.mrb[0].mxu0
    %v657 = vadd.f32 %v170, %v656
    %v658 = vpop.f32.mrb[0].mxu0
    %659 = vmatprep.mubr.f32.mxu0 0.0
    %660 = vmatmul.mubr.f32.gmra.mrb[0].mxu0 %v312
    %v661 = vpop.f32.mrb[0].mxu0
    %v662 = vadd.f32 %v170, %v661
    %v663 = vpop.f32.mrb[0].mxu0
    %664 = vmatprep.mubr.f32.mxu0 0.0
    %665 = vmatmul.mubr.f32.gmra.mrb[0].mxu0 %v315
    %v666 = vpop.f32.mrb[0].mxu0
    %v667 = vadd.f32 %v170, %v666
    %v668 = vpop.f32.mrb[0].mxu0
    %669 = vmatprep.mubr.f32.mxu0 0.0
    %670 = vmatmul.mubr.f32.gmra.mrb[0].mxu0 %v318
    %v671 = vpop.f32.mrb[0].mxu0
    %v672 = vadd.f32 %v170, %v671
    %v673 = vpop.f32.mrb[0].mxu0
    %674 = vmatprep.mubr.f32.mxu0 0.0
    %675 = vmatmul.mubr.f32.gmra.mrb[0].mxu0 %v321
    %v676 = vpop.f32.mrb[0].mxu0
    %v677 = vadd.f32 %v170, %v676
    %v678 = vpop.f32.mrb[0].mxu0
    %679 = vmatprep.mubr.f32.mxu0 0.0
    %680 = vmatmul.mubr.f32.gmra.mrb[0].mxu0 %v324
    %v681 = vpop.f32.mrb[0].mxu0
    %v682 = vadd.f32 %v170, %v681
    %v683 = vpop.f32.mrb[0].mxu0
    %684 = vmatprep.mubr.f32.mxu0 0.0
    %685 = vmatmul.mubr.f32.gmra.mrb[0].mxu0 %v327
    %v686 = vpop.f32.mrb[0].mxu0
    %v687 = vadd.f32 %v170, %v686
    %v688 = vpop.f32.mrb[0].mxu0
    %689 = vmatprep.mubr.f32.mxu0 0.0
    %690 = vmatmul.mubr.f32.gmra.mrb[0].mxu0 %v330
    %v691 = vpop.f32.mrb[0].mxu0
    %v692 = vadd.f32 %v170, %v691
    %v693 = vpop.f32.mrb[0].mxu0
    %694 = vmatprep.mubr.f32.mxu0 0.0
    %695 = vmatmul.mubr.f32.gmra.mrb[0].mxu0 %v333
    %v696 = vpop.f32.mrb[0].mxu0
    %v697 = vadd.f32 %v170, %v696
    %v698 = vpop.f32.mrb[0].mxu0
    %699 = vmatprep.mubr.f32.mxu0 0.0
    %700 = vmatmul.mubr.f32.gmra.mrb[0].mxu0 %v336
    %v701 = vpop.f32.mrb[0].mxu0
    %v702 = vadd.f32 %v170, %v701
    %v703 = vpop.f32.mrb[0].mxu0
    %704 = vmatprep.mubr.f32.mxu0 0.0
    %705 = vmatmul.mubr.f32.gmra.mrb[0].mxu0 %v339
    %v706 = vpop.f32.mrb[0].mxu0
    %v707 = vadd.f32 %v170, %v706
    %v708 = vpop.f32.mrb[0].mxu0
    %709 = vmatprep.mubr.f32.mxu0 0.0
    %710 = vmatmul.mubr.f32.gmra.mrb[0].mxu0 %v342
    %v711 = vpop.f32.mrb[0].mxu0
    %v712 = vadd.f32 %v170, %v711
    %v713 = vpop.f32.mrb[0].mxu0
    %714 = vmatprep.mubr.f32.mxu0 0.0
    %715 = vmatmul.mubr.f32.gmra.mrb[0].mxu0 %v345
    %v716 = vpop.f32.mrb[0].mxu0
    %v717 = vadd.f32 %v170, %v716
    %v718 = vpop.f32.mrb[0].mxu0
    %719 = vmatprep.mubr.f32.mxu0 0.0
    %720 = vmatmul.mubr.f32.gmra.mrb[0].mxu0 %v348
    %v721 = vpop.f32.mrb[0].mxu0
    %v722 = vadd.f32 %v170, %v721
    %v723 = vpop.f32.mrb[0].mxu0
    %724 = vmatprep.mubr.f32.mxu0 0.0
    %725 = vmatmul.mubr.f32.gmra.mrb[0].mxu0 %v351
    %v726 = vpop.f32.mrb[0].mxu0
    %v727 = vadd.f32 %v170, %v726
    %v728 = vpop.f32.mrb[0].mxu0
    %729 = vmatprep.mubr.f32.mxu0 0.0
    %730 = vmatmul.mubr.f32.gmra.mrb[0].mxu0 %v354
    %v731 = vpop.f32.mrb[0].mxu0
    %v732 = vadd.f32 %v170, %v731
    %v733 = vpop.f32.mrb[0].mxu0
    %734 = vmatprep.mubr.f32.mxu0 0.0
    %735 = vmatmul.mubr.f32.gmra.mrb[0].mxu0 %v357
    %v736 = vpop.f32.mrb[0].mxu0
    %v737 = vadd.f32 %v170, %v736
    %v738 = vpop.f32.mrb[0].mxu0
    %739 = vmatprep.mubr.f32.mxu0 0.0
    %740 = vmatmul.mubr.f32.gmra.mrb[0].mxu0 %v360
    %v741 = vpop.f32.mrb[0].mxu0
    %v742 = vadd.f32 %v170, %v741
    %v743 = vpop.f32.mrb[0].mxu0
    %744 = vmatprep.mubr.f32.mxu0 0.0
    %745 = vmatmul.mubr.f32.gmra.mrb[0].mxu0 %v363
    %v746 = vpop.f32.mrb[0].mxu0
    %v747 = vadd.f32 %v170, %v746
    %v748 = vpop.f32.mrb[0].mxu0
    %749 = vdwg.mxu0
    %v750 = vmax.f32 %v432, 0.0
    %v751 = vmax.f32 %v437, 0.0
    %v752 = vmax.f32 %v442, 0.0
    %v753 = vmax.f32 %v447, 0.0
    %v754 = vmax.f32 %v452, 0.0
    %v755 = vmax.f32 %v457, 0.0
    %v756 = vmax.f32 %v462, 0.0
    %v757 = vmax.f32 %v467, 0.0
    %v758 = vmax.f32 %v472, 0.0
    %v759 = vmax.f32 %v477, 0.0
    %v760 = vmax.f32 %v482, 0.0
    %v761 = vmax.f32 %v487, 0.0
    %v762 = vmax.f32 %v492, 0.0
    %v763 = vmax.f32 %v497, 0.0
    %v764 = vmax.f32 %v502, 0.0
    %v765 = vmax.f32 %v507, 0.0
    %v766 = vmax.f32 %v512, 0.0
    %v767 = vmax.f32 %v517, 0.0
    %v768 = vmax.f32 %v522, 0.0
    %v769 = vmax.f32 %v527, 0.0
    %v770 = vmax.f32 %v532, 0.0
    %v771 = vmax.f32 %v537, 0.0
    %v772 = vmax.f32 %v542, 0.0
    %v773 = vmax.f32 %v547, 0.0
    %v774 = vmax.f32 %v552, 0.0
    %v775 = vmax.f32 %v557, 0.0
    %v776 = vmax.f32 %v562, 0.0
    %v777 = vmax.f32 %v567, 0.0
    %v778 = vmax.f32 %v572, 0.0
    %v779 = vmax.f32 %v577, 0.0
    %v780 = vmax.f32 %v582, 0.0
    %v781 = vmax.f32 %v587, 0.0
    %v782 = vmax.f32 %v592, 0.0
    %v783 = vmax.f32 %v597, 0.0
    %v784 = vmax.f32 %v602, 0.0
    %v785 = vmax.f32 %v607, 0.0
    %v786 = vmax.f32 %v612, 0.0
    %v787 = vmax.f32 %v617, 0.0
    %v788 = vmax.f32 %v622, 0.0
    %v789 = vmax.f32 %v627, 0.0
    %v790 = vmax.f32 %v632, 0.0
    %v791 = vmax.f32 %v637, 0.0
    %v792 = vmax.f32 %v642, 0.0
    %v793 = vmax.f32 %v647, 0.0
    %v794 = vmax.f32 %v652, 0.0
    %v795 = vmax.f32 %v657, 0.0
    %v796 = vmax.f32 %v662, 0.0
    %v797 = vmax.f32 %v667, 0.0
    %v798 = vmax.f32 %v672, 0.0
    %v799 = vmax.f32 %v677, 0.0
    %v800 = vmax.f32 %v682, 0.0
    %v801 = vmax.f32 %v687, 0.0
    %v802 = vmax.f32 %v692, 0.0
    %v803 = vmax.f32 %v697, 0.0
    %v804 = vmax.f32 %v702, 0.0
    %v805 = vmax.f32 %v707, 0.0
    %v806 = vmax.f32 %v712, 0.0
    %v807 = vmax.f32 %v717, 0.0
    %v808 = vmax.f32 %v722, 0.0
    %v809 = vmax.f32 %v727, 0.0
    %v810 = vmax.f32 %v732, 0.0
    %v811 = vmax.f32 %v737, 0.0
    %v812 = vmax.f32 %v742, 0.0
    %v813 = vmax.f32 %v747, 0.0
    %v814 = vld [vmem:[%s2] sm:$0xff]
    %v815 = vld [vmem:[%s2 + $0x8] sm:$0xff]
    %v816 = vld [vmem:[%s2 + $0x10] sm:$0xff]
    %v817 = vld [vmem:[%s2 + $0x18] sm:$0xff]
    %v818 = vld [vmem:[%s3] sm:$0x1]
    %v820 = vlaneseq
    %v821 = vshrl.u32 %v820, 7
    %v822 = vsub.s32 0, %v821
    %v823 = vrot.slane %v818, %v822
    %v826 = vsel %vm172, %v750, 0
    %v829 = vsel %vm172, %v751, 0
    %v832 = vsel %vm172, %v752, 0
    %v835 = vsel %vm172, %v753, 0
    %v838 = vsel %vm172, %v754, 0
    %v841 = vsel %vm172, %v755, 0
    %v844 = vsel %vm172, %v756, 0
    %v847 = vsel %vm172, %v757, 0
    %v850 = vsel %vm172, %v758, 0
    %v853 = vsel %vm172, %v759, 0
    %v856 = vsel %vm172, %v760, 0
    %v859 = vsel %vm172, %v761, 0
    %v862 = vsel %vm172, %v762, 0
    %v865 = vsel %vm172, %v763, 0
    %v868 = vsel %vm172, %v764, 0
    %v871 = vsel %vm172, %v765, 0
    %v874 = vsel %vm172, %v766, 0
    %v877 = vsel %vm172, %v767, 0
    %v880 = vsel %vm172, %v768, 0
    %v883 = vsel %vm172, %v769, 0
    %v886 = vsel %vm172, %v770, 0
    %v889 = vsel %vm172, %v771, 0
    %v892 = vsel %vm172, %v772, 0
    %v895 = vsel %vm172, %v773, 0
    %v898 = vsel %vm172, %v774, 0
    %v901 = vsel %vm172, %v775, 0
    %v904 = vsel %vm172, %v776, 0
    %v907 = vsel %vm172, %v777, 0
    %v910 = vsel %vm172, %v778, 0
    %v913 = vsel %vm172, %v779, 0
    %v916 = vsel %vm172, %v780, 0
    %v919 = vsel %vm172, %v781, 0
    %v922 = vsel %vm172, %v782, 0
    %v925 = vsel %vm172, %v783, 0
    %v928 = vsel %vm172, %v784, 0
    %v931 = vsel %vm172, %v785, 0
    %v934 = vsel %vm172, %v786, 0
    %v937 = vsel %vm172, %v787, 0
    %v940 = vsel %vm172, %v788, 0
    %v943 = vsel %vm172, %v789, 0
    %v946 = vsel %vm172, %v790, 0
    %v949 = vsel %vm172, %v791, 0
    %v952 = vsel %vm172, %v792, 0
    %v955 = vsel %vm172, %v793, 0
    %v958 = vsel %vm172, %v794, 0
    %v961 = vsel %vm172, %v795, 0
    %v964 = vsel %vm172, %v796, 0
    %v967 = vsel %vm172, %v797, 0
    %v970 = vsel %vm172, %v798, 0
    %v973 = vsel %vm172, %v799, 0
    %v976 = vsel %vm172, %v800, 0
    %v979 = vsel %vm172, %v801, 0
    %v982 = vsel %vm172, %v802, 0
    %v985 = vsel %vm172, %v803, 0
    %v988 = vsel %vm172, %v804, 0
    %v991 = vsel %vm172, %v805, 0
    %v994 = vsel %vm172, %v806, 0
    %v997 = vsel %vm172, %v807, 0
    %v1000 = vsel %vm172, %v808, 0
    %v1003 = vsel %vm172, %v809, 0
    %v1006 = vsel %vm172, %v810, 0
    %v1009 = vsel %vm172, %v811, 0
    %v1012 = vsel %vm172, %v812, 0
    %v1015 = vsel %vm172, %v813, 0
    %1017 = vmatprep.subr.mxu0 0.0
    %1018 = vmatpush1.msra.mxu0 %v814
    %1019 = vmatprep.subr.mxu0 0.0
    %1020 = vmatpush1.msra.mxu0 %v815
    %1021 = vmatprep.subr.mxu0 0.0
    %1022 = vmatpush1.msra.mxu0 %v816
    %1023 = vmatprep.subr.mxu0 0.0
    %1024 = vmatpush1.msra.mxu0 %v817
    %1025 = vmatprep.subr.mxu0 0.0
    %1026 = vmatpush1.msra.mxu0 0.0
    %1027 = vmatprep.subr.mxu0 0.0
    %1028 = vmatpush1.msra.mxu0 0.0
    %1029 = vmatprep.subr.mxu0 0.0
    %1030 = vmatpush1.msra.mxu0 0.0
    %1031 = vmatprep.subr.mxu0 0.0
    %1032 = vmatpush1.msra.mxu0 0.0
    %1033 = vmatprep.subr.mxu0 0.0
    %1034 = vmatpush1.msra.mxu0 0.0
    %1035 = vmatprep.subr.mxu0 0.0
    %1036 = vmatpush1.msra.mxu0 0.0
    %1037 = vmatprep.subr.mxu0 0.0
    %1038 = vmatpush1.msra.mxu0 0.0
    %1039 = vmatprep.subr.mxu0 0.0
    %1040 = vmatpush1.msra.mxu0 0.0
    %1041 = vmatprep.subr.mxu0 0.0
    %1042 = vmatpush1.msra.mxu0 0.0
    %1043 = vmatprep.subr.mxu0 0.0
    %1044 = vmatpush1.msra.mxu0 0.0
    %1045 = vmatprep.subr.mxu0 0.0
    %1046 = vmatpush1.msra.mxu0 0.0
    %1047 = vmatprep.subr.mxu0 0.0
    %1048 = vmatpush1.msra.mxu0 0.0
    %1049 = vmatprep.subr.mxu0 0.0
    %1050 = vmatpush1.msra.mxu0 0.0
    %1051 = vmatprep.subr.mxu0 0.0
    %1052 = vmatpush1.msra.mxu0 0.0
    %1053 = vmatprep.subr.mxu0 0.0
    %1054 = vmatpush1.msra.mxu0 0.0
    %1055 = vmatprep.subr.mxu0 0.0
    %1056 = vmatpush1.msra.mxu0 0.0
    %1057 = vmatprep.subr.mxu0 0.0
    %1058 = vmatpush1.msra.mxu0 0.0
    %1059 = vmatprep.subr.mxu0 0.0
    %1060 = vmatpush1.msra.mxu0 0.0
    %1061 = vmatprep.subr.mxu0 0.0
    %1062 = vmatpush1.msra.mxu0 0.0
    %1063 = vmatprep.subr.mxu0 0.0
    %1064 = vmatpush1.msra.mxu0 0.0
    %1065 = vmatprep.subr.mxu0 0.0
    %1066 = vmatpush1.msra.mxu0 0.0
    %1067 = vmatprep.subr.mxu0 0.0
    %1068 = vmatpush1.msra.mxu0 0.0
    %1069 = vmatprep.subr.mxu0 0.0
    %1070 = vmatpush1.msra.mxu0 0.0
    %1071 = vmatprep.subr.mxu0 0.0
    %1072 = vmatpush1.msra.mxu0 0.0
    %1073 = vmatprep.subr.mxu0 0.0
    %1074 = vmatpush1.msra.mxu0 0.0
    %1075 = vmatprep.subr.mxu0 0.0
    %1076 = vmatpush1.msra.mxu0 0.0
    %1077 = vmatprep.subr.mxu0 0.0
    %1078 = vmatpush1.msra.mxu0 0.0
    %1079 = vmatprep.subr.mxu0 0.0
    %1080 = vmatpush1.msra.mxu0 0.0
    %1081 = vmatprep.mubr.f32.mxu0 0.0
    %1082 = vmatmul.mubr.f32.gmra.mrb[0].mxu0 %v826
    %v1083 = vpop.f32.mrb[0].mxu0
    %v1084 = vadd.f32 %v823, %v1083
    %v1085 = vpop.f32.mrb[0].mxu0
    %1086 = vmatprep.mubr.f32.mxu0 0.0
    %1087 = vmatmul.mubr.f32.gmra.mrb[0].mxu0 %v829
    %v1088 = vpop.f32.mrb[0].mxu0
    %v1089 = vadd.f32 %v823, %v1088
    %v1090 = vpop.f32.mrb[0].mxu0
    %1091 = vmatprep.mubr.f32.mxu0 0.0
    %1092 = vmatmul.mubr.f32.gmra.mrb[0].mxu0 %v832
    %v1093 = vpop.f32.mrb[0].mxu0
    %v1094 = vadd.f32 %v823, %v1093
    %v1095 = vpop.f32.mrb[0].mxu0
    %1096 = vmatprep.mubr.f32.mxu0 0.0
    %1097 = vmatmul.mubr.f32.gmra.mrb[0].mxu0 %v835
    %v1098 = vpop.f32.mrb[0].mxu0
    %v1099 = vadd.f32 %v823, %v1098
    %v1100 = vpop.f32.mrb[0].mxu0
    %1101 = vmatprep.mubr.f32.mxu0 0.0
    %1102 = vmatmul.mubr.f32.gmra.mrb[0].mxu0 %v838
    %v1103 = vpop.f32.mrb[0].mxu0
    %v1104 = vadd.f32 %v823, %v1103
    %v1105 = vpop.f32.mrb[0].mxu0
    %1106 = vmatprep.mubr.f32.mxu0 0.0
    %1107 = vmatmul.mubr.f32.gmra.mrb[0].mxu0 %v841
    %v1108 = vpop.f32.mrb[0].mxu0
    %v1109 = vadd.f32 %v823, %v1108
    %v1110 = vpop.f32.mrb[0].mxu0
    %1111 = vmatprep.mubr.f32.mxu0 0.0
    %1112 = vmatmul.mubr.f32.gmra.mrb[0].mxu0 %v844
    %v1113 = vpop.f32.mrb[0].mxu0
    %v1114 = vadd.f32 %v823, %v1113
    %v1115 = vpop.f32.mrb[0].mxu0
    %1116 = vmatprep.mubr.f32.mxu0 0.0
    %1117 = vmatmul.mubr.f32.gmra.mrb[0].mxu0 %v847
    %v1118 = vpop.f32.mrb[0].mxu0
    %v1119 = vadd.f32 %v823, %v1118
    %v1120 = vpop.f32.mrb[0].mxu0
    %1121 = vmatprep.mubr.f32.mxu0 0.0
    %1122 = vmatmul.mubr.f32.gmra.mrb[0].mxu0 %v850
    %v1123 = vpop.f32.mrb[0].mxu0
    %v1124 = vadd.f32 %v823, %v1123
    %v1125 = vpop.f32.mrb[0].mxu0
    %1126 = vmatprep.mubr.f32.mxu0 0.0
    %1127 = vmatmul.mubr.f32.gmra.mrb[0].mxu0 %v853
    %v1128 = vpop.f32.mrb[0].mxu0
    %v1129 = vadd.f32 %v823, %v1128
    %v1130 = vpop.f32.mrb[0].mxu0
    %1131 = vmatprep.mubr.f32.mxu0 0.0
    %1132 = vmatmul.mubr.f32.gmra.mrb[0].mxu0 %v856
    %v1133 = vpop.f32.mrb[0].mxu0
    %v1134 = vadd.f32 %v823, %v1133
    %v1135 = vpop.f32.mrb[0].mxu0
    %1136 = vmatprep.mubr.f32.mxu0 0.0
    %1137 = vmatmul.mubr.f32.gmra.mrb[0].mxu0 %v859
    %v1138 = vpop.f32.mrb[0].mxu0
    %v1139 = vadd.f32 %v823, %v1138
    %v1140 = vpop.f32.mrb[0].mxu0
    %1141 = vmatprep.mubr.f32.mxu0 0.0
    %1142 = vmatmul.mubr.f32.gmra.mrb[0].mxu0 %v862
    %v1143 = vpop.f32.mrb[0].mxu0
    %v1144 = vadd.f32 %v823, %v1143
    %v1145 = vpop.f32.mrb[0].mxu0
    %1146 = vmatprep.mubr.f32.mxu0 0.0
    %1147 = vmatmul.mubr.f32.gmra.mrb[0].mxu0 %v865
    %v1148 = vpop.f32.mrb[0].mxu0
    %v1149 = vadd.f32 %v823, %v1148
    %v1150 = vpop.f32.mrb[0].mxu0
    %1151 = vmatprep.mubr.f32.mxu0 0.0
    %1152 = vmatmul.mubr.f32.gmra.mrb[0].mxu0 %v868
    %v1153 = vpop.f32.mrb[0].mxu0
    %v1154 = vadd.f32 %v823, %v1153
    %v1155 = vpop.f32.mrb[0].mxu0
    %1156 = vmatprep.mubr.f32.mxu0 0.0
    %1157 = vmatmul.mubr.f32.gmra.mrb[0].mxu0 %v871
    %v1158 = vpop.f32.mrb[0].mxu0
    %v1159 = vadd.f32 %v823, %v1158
    %v1160 = vpop.f32.mrb[0].mxu0
    %1161 = vmatprep.mubr.f32.mxu0 0.0
    %1162 = vmatmul.mubr.f32.gmra.mrb[0].mxu0 %v874
    %v1163 = vpop.f32.mrb[0].mxu0
    %v1164 = vadd.f32 %v823, %v1163
    %v1165 = vpop.f32.mrb[0].mxu0
    %1166 = vmatprep.mubr.f32.mxu0 0.0
    %1167 = vmatmul.mubr.f32.gmra.mrb[0].mxu0 %v877
    %v1168 = vpop.f32.mrb[0].mxu0
    %v1169 = vadd.f32 %v823, %v1168
    %v1170 = vpop.f32.mrb[0].mxu0
    %1171 = vmatprep.mubr.f32.mxu0 0.0
    %1172 = vmatmul.mubr.f32.gmra.mrb[0].mxu0 %v880
    %v1173 = vpop.f32.mrb[0].mxu0
    %v1174 = vadd.f32 %v823, %v1173
    %v1175 = vpop.f32.mrb[0].mxu0
    %1176 = vmatprep.mubr.f32.mxu0 0.0
    %1177 = vmatmul.mubr.f32.gmra.mrb[0].mxu0 %v883
    %v1178 = vpop.f32.mrb[0].mxu0
    %v1179 = vadd.f32 %v823, %v1178
    %v1180 = vpop.f32.mrb[0].mxu0
    %1181 = vmatprep.mubr.f32.mxu0 0.0
    %1182 = vmatmul.mubr.f32.gmra.mrb[0].mxu0 %v886
    %v1183 = vpop.f32.mrb[0].mxu0
    %v1184 = vadd.f32 %v823, %v1183
    %v1185 = vpop.f32.mrb[0].mxu0
    %1186 = vmatprep.mubr.f32.mxu0 0.0
    %1187 = vmatmul.mubr.f32.gmra.mrb[0].mxu0 %v889
    %v1188 = vpop.f32.mrb[0].mxu0
    %v1189 = vadd.f32 %v823, %v1188
    %v1190 = vpop.f32.mrb[0].mxu0
    %1191 = vmatprep.mubr.f32.mxu0 0.0
    %1192 = vmatmul.mubr.f32.gmra.mrb[0].mxu0 %v892
    %v1193 = vpop.f32.mrb[0].mxu0
    %v1194 = vadd.f32 %v823, %v1193
    %v1195 = vpop.f32.mrb[0].mxu0
    %1196 = vmatprep.mubr.f32.mxu0 0.0
    %1197 = vmatmul.mubr.f32.gmra.mrb[0].mxu0 %v895
    %v1198 = vpop.f32.mrb[0].mxu0
    %v1199 = vadd.f32 %v823, %v1198
    %v1200 = vpop.f32.mrb[0].mxu0
    %1201 = vmatprep.mubr.f32.mxu0 0.0
    %1202 = vmatmul.mubr.f32.gmra.mrb[0].mxu0 %v898
    %v1203 = vpop.f32.mrb[0].mxu0
    %v1204 = vadd.f32 %v823, %v1203
    %v1205 = vpop.f32.mrb[0].mxu0
    %1206 = vmatprep.mubr.f32.mxu0 0.0
    %1207 = vmatmul.mubr.f32.gmra.mrb[0].mxu0 %v901
    %v1208 = vpop.f32.mrb[0].mxu0
    %v1209 = vadd.f32 %v823, %v1208
    %v1210 = vpop.f32.mrb[0].mxu0
    %1211 = vmatprep.mubr.f32.mxu0 0.0
    %1212 = vmatmul.mubr.f32.gmra.mrb[0].mxu0 %v904
    %v1213 = vpop.f32.mrb[0].mxu0
    %v1214 = vadd.f32 %v823, %v1213
    %v1215 = vpop.f32.mrb[0].mxu0
    %1216 = vmatprep.mubr.f32.mxu0 0.0
    %1217 = vmatmul.mubr.f32.gmra.mrb[0].mxu0 %v907
    %v1218 = vpop.f32.mrb[0].mxu0
    %v1219 = vadd.f32 %v823, %v1218
    %v1220 = vpop.f32.mrb[0].mxu0
    %1221 = vmatprep.mubr.f32.mxu0 0.0
    %1222 = vmatmul.mubr.f32.gmra.mrb[0].mxu0 %v910
    %v1223 = vpop.f32.mrb[0].mxu0
    %v1224 = vadd.f32 %v823, %v1223
    %v1225 = vpop.f32.mrb[0].mxu0
    %1226 = vmatprep.mubr.f32.mxu0 0.0
    %1227 = vmatmul.mubr.f32.gmra.mrb[0].mxu0 %v913
    %v1228 = vpop.f32.mrb[0].mxu0
    %v1229 = vadd.f32 %v823, %v1228
    %v1230 = vpop.f32.mrb[0].mxu0
    %1231 = vmatprep.mubr.f32.mxu0 0.0
    %1232 = vmatmul.mubr.f32.gmra.mrb[0].mxu0 %v916
    %v1233 = vpop.f32.mrb[0].mxu0
    %v1234 = vadd.f32 %v823, %v1233
    %v1235 = vpop.f32.mrb[0].mxu0
    %1236 = vmatprep.mubr.f32.mxu0 0.0
    %1237 = vmatmul.mubr.f32.gmra.mrb[0].mxu0 %v919
    %v1238 = vpop.f32.mrb[0].mxu0
    %v1239 = vadd.f32 %v823, %v1238
    %v1240 = vpop.f32.mrb[0].mxu0
    %1241 = vmatprep.mubr.f32.mxu0 0.0
    %1242 = vmatmul.mubr.f32.gmra.mrb[0].mxu0 %v922
    %v1243 = vpop.f32.mrb[0].mxu0
    %v1244 = vadd.f32 %v823, %v1243
    %v1245 = vpop.f32.mrb[0].mxu0
    %1246 = vmatprep.mubr.f32.mxu0 0.0
    %1247 = vmatmul.mubr.f32.gmra.mrb[0].mxu0 %v925
    %v1248 = vpop.f32.mrb[0].mxu0
    %v1249 = vadd.f32 %v823, %v1248
    %v1250 = vpop.f32.mrb[0].mxu0
    %1251 = vmatprep.mubr.f32.mxu0 0.0
    %1252 = vmatmul.mubr.f32.gmra.mrb[0].mxu0 %v928
    %v1253 = vpop.f32.mrb[0].mxu0
    %v1254 = vadd.f32 %v823, %v1253
    %v1255 = vpop.f32.mrb[0].mxu0
    %1256 = vmatprep.mubr.f32.mxu0 0.0
    %1257 = vmatmul.mubr.f32.gmra.mrb[0].mxu0 %v931
    %v1258 = vpop.f32.mrb[0].mxu0
    %v1259 = vadd.f32 %v823, %v1258
    %v1260 = vpop.f32.mrb[0].mxu0
    %1261 = vmatprep.mubr.f32.mxu0 0.0
    %1262 = vmatmul.mubr.f32.gmra.mrb[0].mxu0 %v934
    %v1263 = vpop.f32.mrb[0].mxu0
    %v1264 = vadd.f32 %v823, %v1263
    %v1265 = vpop.f32.mrb[0].mxu0
    %1266 = vmatprep.mubr.f32.mxu0 0.0
    %1267 = vmatmul.mubr.f32.gmra.mrb[0].mxu0 %v937
    %v1268 = vpop.f32.mrb[0].mxu0
    %v1269 = vadd.f32 %v823, %v1268
    %v1270 = vpop.f32.mrb[0].mxu0
    %1271 = vmatprep.mubr.f32.mxu0 0.0
    %1272 = vmatmul.mubr.f32.gmra.mrb[0].mxu0 %v940
    %v1273 = vpop.f32.mrb[0].mxu0
    %v1274 = vadd.f32 %v823, %v1273
    %v1275 = vpop.f32.mrb[0].mxu0
    %1276 = vmatprep.mubr.f32.mxu0 0.0
    %1277 = vmatmul.mubr.f32.gmra.mrb[0].mxu0 %v943
    %v1278 = vpop.f32.mrb[0].mxu0
    %v1279 = vadd.f32 %v823, %v1278
    %v1280 = vpop.f32.mrb[0].mxu0
    %1281 = vmatprep.mubr.f32.mxu0 0.0
    %1282 = vmatmul.mubr.f32.gmra.mrb[0].mxu0 %v946
    %v1283 = vpop.f32.mrb[0].mxu0
    %v1284 = vadd.f32 %v823, %v1283
    %v1285 = vpop.f32.mrb[0].mxu0
    %1286 = vmatprep.mubr.f32.mxu0 0.0
    %1287 = vmatmul.mubr.f32.gmra.mrb[0].mxu0 %v949
    %v1288 = vpop.f32.mrb[0].mxu0
    %v1289 = vadd.f32 %v823, %v1288
    %v1290 = vpop.f32.mrb[0].mxu0
    %1291 = vmatprep.mubr.f32.mxu0 0.0
    %1292 = vmatmul.mubr.f32.gmra.mrb[0].mxu0 %v952
    %v1293 = vpop.f32.mrb[0].mxu0
    %v1294 = vadd.f32 %v823, %v1293
    %v1295 = vpop.f32.mrb[0].mxu0
    %1296 = vmatprep.mubr.f32.mxu0 0.0
    %1297 = vmatmul.mubr.f32.gmra.mrb[0].mxu0 %v955
    %v1298 = vpop.f32.mrb[0].mxu0
    %v1299 = vadd.f32 %v823, %v1298
    %v1300 = vpop.f32.mrb[0].mxu0
    %1301 = vmatprep.mubr.f32.mxu0 0.0
    %1302 = vmatmul.mubr.f32.gmra.mrb[0].mxu0 %v958
    %v1303 = vpop.f32.mrb[0].mxu0
    %v1304 = vadd.f32 %v823, %v1303
    %v1305 = vpop.f32.mrb[0].mxu0
    %1306 = vmatprep.mubr.f32.mxu0 0.0
    %1307 = vmatmul.mubr.f32.gmra.mrb[0].mxu0 %v961
    %v1308 = vpop.f32.mrb[0].mxu0
    %v1309 = vadd.f32 %v823, %v1308
    %v1310 = vpop.f32.mrb[0].mxu0
    %1311 = vmatprep.mubr.f32.mxu0 0.0
    %1312 = vmatmul.mubr.f32.gmra.mrb[0].mxu0 %v964
    %v1313 = vpop.f32.mrb[0].mxu0
    %v1314 = vadd.f32 %v823, %v1313
    %v1315 = vpop.f32.mrb[0].mxu0
    %1316 = vmatprep.mubr.f32.mxu0 0.0
    %1317 = vmatmul.mubr.f32.gmra.mrb[0].mxu0 %v967
    %v1318 = vpop.f32.mrb[0].mxu0
    %v1319 = vadd.f32 %v823, %v1318
    %v1320 = vpop.f32.mrb[0].mxu0
    %1321 = vmatprep.mubr.f32.mxu0 0.0
    %1322 = vmatmul.mubr.f32.gmra.mrb[0].mxu0 %v970
    %v1323 = vpop.f32.mrb[0].mxu0
    %v1324 = vadd.f32 %v823, %v1323
    %v1325 = vpop.f32.mrb[0].mxu0
    %1326 = vmatprep.mubr.f32.mxu0 0.0
    %1327 = vmatmul.mubr.f32.gmra.mrb[0].mxu0 %v973
    %v1328 = vpop.f32.mrb[0].mxu0
    %v1329 = vadd.f32 %v823, %v1328
    %v1330 = vpop.f32.mrb[0].mxu0
    %1331 = vmatprep.mubr.f32.mxu0 0.0
    %1332 = vmatmul.mubr.f32.gmra.mrb[0].mxu0 %v976
    %v1333 = vpop.f32.mrb[0].mxu0
    %v1334 = vadd.f32 %v823, %v1333
    %v1335 = vpop.f32.mrb[0].mxu0
    %1336 = vmatprep.mubr.f32.mxu0 0.0
    %1337 = vmatmul.mubr.f32.gmra.mrb[0].mxu0 %v979
    %v1338 = vpop.f32.mrb[0].mxu0
    %v1339 = vadd.f32 %v823, %v1338
    %v1340 = vpop.f32.mrb[0].mxu0
    %1341 = vmatprep.mubr.f32.mxu0 0.0
    %1342 = vmatmul.mubr.f32.gmra.mrb[0].mxu0 %v982
    %v1343 = vpop.f32.mrb[0].mxu0
    %v1344 = vadd.f32 %v823, %v1343
    %v1345 = vpop.f32.mrb[0].mxu0
    %1346 = vmatprep.mubr.f32.mxu0 0.0
    %1347 = vmatmul.mubr.f32.gmra.mrb[0].mxu0 %v985
    %v1348 = vpop.f32.mrb[0].mxu0
    %v1349 = vadd.f32 %v823, %v1348
    %v1350 = vpop.f32.mrb[0].mxu0
    %1351 = vmatprep.mubr.f32.mxu0 0.0
    %1352 = vmatmul.mubr.f32.gmra.mrb[0].mxu0 %v988
    %v1353 = vpop.f32.mrb[0].mxu0
    %v1354 = vadd.f32 %v823, %v1353
    %v1355 = vpop.f32.mrb[0].mxu0
    %1356 = vmatprep.mubr.f32.mxu0 0.0
    %1357 = vmatmul.mubr.f32.gmra.mrb[0].mxu0 %v991
    %v1358 = vpop.f32.mrb[0].mxu0
    %v1359 = vadd.f32 %v823, %v1358
    %v1360 = vpop.f32.mrb[0].mxu0
    %1361 = vmatprep.mubr.f32.mxu0 0.0
    %1362 = vmatmul.mubr.f32.gmra.mrb[0].mxu0 %v994
    %v1363 = vpop.f32.mrb[0].mxu0
    %v1364 = vadd.f32 %v823, %v1363
    %v1365 = vpop.f32.mrb[0].mxu0
    %1366 = vmatprep.mubr.f32.mxu0 0.0
    %1367 = vmatmul.mubr.f32.gmra.mrb[0].mxu0 %v997
    %v1368 = vpop.f32.mrb[0].mxu0
    %v1369 = vadd.f32 %v823, %v1368
    %v1370 = vpop.f32.mrb[0].mxu0
    %1371 = vmatprep.mubr.f32.mxu0 0.0
    %1372 = vmatmul.mubr.f32.gmra.mrb[0].mxu0 %v1000
    %v1373 = vpop.f32.mrb[0].mxu0
    %v1374 = vadd.f32 %v823, %v1373
    %v1375 = vpop.f32.mrb[0].mxu0
    %1376 = vmatprep.mubr.f32.mxu0 0.0
    %1377 = vmatmul.mubr.f32.gmra.mrb[0].mxu0 %v1003
    %v1378 = vpop.f32.mrb[0].mxu0
    %v1379 = vadd.f32 %v823, %v1378
    %v1380 = vpop.f32.mrb[0].mxu0
    %1381 = vmatprep.mubr.f32.mxu0 0.0
    %1382 = vmatmul.mubr.f32.gmra.mrb[0].mxu0 %v1006
    %v1383 = vpop.f32.mrb[0].mxu0
    %v1384 = vadd.f32 %v823, %v1383
    %v1385 = vpop.f32.mrb[0].mxu0
    %1386 = vmatprep.mubr.f32.mxu0 0.0
    %1387 = vmatmul.mubr.f32.gmra.mrb[0].mxu0 %v1009
    %v1388 = vpop.f32.mrb[0].mxu0
    %v1389 = vadd.f32 %v823, %v1388
    %v1390 = vpop.f32.mrb[0].mxu0
    %1391 = vmatprep.mubr.f32.mxu0 0.0
    %1392 = vmatmul.mubr.f32.gmra.mrb[0].mxu0 %v1012
    %v1393 = vpop.f32.mrb[0].mxu0
    %v1394 = vadd.f32 %v823, %v1393
    %v1395 = vpop.f32.mrb[0].mxu0
    %1396 = vmatprep.mubr.f32.mxu0 0.0
    %1397 = vmatmul.mubr.f32.gmra.mrb[0].mxu0 %v1015
    %v1398 = vpop.f32.mrb[0].mxu0
    %v1399 = vadd.f32 %v823, %v1398
    %v1400 = vpop.f32.mrb[0].mxu0
    %1401 = vdwg.mxu0
    %v1402 = vmax.f32 %v1084, 0.0
    %v1403 = vmax.f32 %v1089, 0.0
    %v1404 = vmax.f32 %v1094, 0.0
    %v1405 = vmax.f32 %v1099, 0.0
    %v1406 = vmax.f32 %v1104, 0.0
    %v1407 = vmax.f32 %v1109, 0.0
    %v1408 = vmax.f32 %v1114, 0.0
    %v1409 = vmax.f32 %v1119, 0.0
    %v1410 = vmax.f32 %v1124, 0.0
    %v1411 = vmax.f32 %v1129, 0.0
    %v1412 = vmax.f32 %v1134, 0.0
    %v1413 = vmax.f32 %v1139, 0.0
    %v1414 = vmax.f32 %v1144, 0.0
    %v1415 = vmax.f32 %v1149, 0.0
    %v1416 = vmax.f32 %v1154, 0.0
    %v1417 = vmax.f32 %v1159, 0.0
    %v1418 = vmax.f32 %v1164, 0.0
    %v1419 = vmax.f32 %v1169, 0.0
    %v1420 = vmax.f32 %v1174, 0.0
    %v1421 = vmax.f32 %v1179, 0.0
    %v1422 = vmax.f32 %v1184, 0.0
    %v1423 = vmax.f32 %v1189, 0.0
    %v1424 = vmax.f32 %v1194, 0.0
    %v1425 = vmax.f32 %v1199, 0.0
    %v1426 = vmax.f32 %v1204, 0.0
    %v1427 = vmax.f32 %v1209, 0.0
    %v1428 = vmax.f32 %v1214, 0.0
    %v1429 = vmax.f32 %v1219, 0.0
    %v1430 = vmax.f32 %v1224, 0.0
    %v1431 = vmax.f32 %v1229, 0.0
    %v1432 = vmax.f32 %v1234, 0.0
    %v1433 = vmax.f32 %v1239, 0.0
    %v1434 = vmax.f32 %v1244, 0.0
    %v1435 = vmax.f32 %v1249, 0.0
    %v1436 = vmax.f32 %v1254, 0.0
    %v1437 = vmax.f32 %v1259, 0.0
    %v1438 = vmax.f32 %v1264, 0.0
    %v1439 = vmax.f32 %v1269, 0.0
    %v1440 = vmax.f32 %v1274, 0.0
    %v1441 = vmax.f32 %v1279, 0.0
    %v1442 = vmax.f32 %v1284, 0.0
    %v1443 = vmax.f32 %v1289, 0.0
    %v1444 = vmax.f32 %v1294, 0.0
    %v1445 = vmax.f32 %v1299, 0.0
    %v1446 = vmax.f32 %v1304, 0.0
    %v1447 = vmax.f32 %v1309, 0.0
    %v1448 = vmax.f32 %v1314, 0.0
    %v1449 = vmax.f32 %v1319, 0.0
    %v1450 = vmax.f32 %v1324, 0.0
    %v1451 = vmax.f32 %v1329, 0.0
    %v1452 = vmax.f32 %v1334, 0.0
    %v1453 = vmax.f32 %v1339, 0.0
    %v1454 = vmax.f32 %v1344, 0.0
    %v1455 = vmax.f32 %v1349, 0.0
    %v1456 = vmax.f32 %v1354, 0.0
    %v1457 = vmax.f32 %v1359, 0.0
    %v1458 = vmax.f32 %v1364, 0.0
    %v1459 = vmax.f32 %v1369, 0.0
    %v1460 = vmax.f32 %v1374, 0.0
    %v1461 = vmax.f32 %v1379, 0.0
    %v1462 = vmax.f32 %v1384, 0.0
    %v1463 = vmax.f32 %v1389, 0.0
    %v1464 = vmax.f32 %v1394, 0.0
    %v1465 = vmax.f32 %v1399, 0.0
    %v1466 = vld [vmem:[%s4] sm:$0xff]
    %v1467 = vld [vmem:[%s5] sm:$0xff]
    %1469 = vset.pattern.permute.xlu0 0
    %1470 = vperm.xlu0 %1469, %v1467
    %v1471 = vpop.permute.xlu0 %1470
    %v1474 = vsel %vm172, %v1466, 0
    %v1477 = vsel %vm172, %v1402, 0
    %v1480 = vsel %vm172, %v1403, 0
    %v1483 = vsel %vm172, %v1404, 0
    %v1486 = vsel %vm172, %v1405, 0
    %v1489 = vsel %vm172, %v1406, 0
    %v1492 = vsel %vm172, %v1407, 0
    %v1495 = vsel %vm172, %v1408, 0
    %v1498 = vsel %vm172, %v1409, 0
    %v1501 = vsel %vm172, %v1410, 0
    %v1504 = vsel %vm172, %v1411, 0
    %v1507 = vsel %vm172, %v1412, 0
    %v1510 = vsel %vm172, %v1413, 0
    %v1513 = vsel %vm172, %v1414, 0
    %v1516 = vsel %vm172, %v1415, 0
    %v1519 = vsel %vm172, %v1416, 0
    %v1522 = vsel %vm172, %v1417, 0
    %1524 = vmatprep.subr.mxu0 0.0
    %1525 = vmatpush1.xpose.msra.mxu0 %v1477
    %1526 = vmatprep.subr.mxu0 0.0
    %1527 = vmatpush1.xpose.msra.mxu0 %v1480
    %1528 = vmatprep.subr.mxu0 0.0
    %1529 = vmatpush1.xpose.msra.mxu0 %v1483
    %1530 = vmatprep.subr.mxu0 0.0
    %1531 = vmatpush1.xpose.msra.mxu0 %v1486
    %1532 = vmatprep.subr.mxu0 0.0
    %1533 = vmatpush1.xpose.msra.mxu0 %v1489
    %1534 = vmatprep.subr.mxu0 0.0
    %1535 = vmatpush1.xpose.msra.mxu0 %v1492
    %1536 = vmatprep.subr.mxu0 0.0
    %1537 = vmatpush1.xpose.msra.mxu0 %v1495
    %1538 = vmatprep.subr.mxu0 0.0
    %1539 = vmatpush1.xpose.msra.mxu0 %v1498
    %1540 = vmatprep.subr.mxu0 0.0
    %1541 = vmatpush1.xpose.msra.mxu0 %v1501
    %1542 = vmatprep.subr.mxu0 0.0
    %1543 = vmatpush1.xpose.msra.mxu0 %v1504
    %1544 = vmatprep.subr.mxu0 0.0
    %1545 = vmatpush1.xpose.msra.mxu0 %v1507
    %1546 = vmatprep.subr.mxu0 0.0
    %1547 = vmatpush1.xpose.msra.mxu0 %v1510
    %1548 = vmatprep.subr.mxu0 0.0
    %1549 = vmatpush1.xpose.msra.mxu0 %v1513
    %1550 = vmatprep.subr.mxu0 0.0
    %1551 = vmatpush1.xpose.msra.mxu0 %v1516
    %1552 = vmatprep.subr.mxu0 0.0
    %1553 = vmatpush1.xpose.msra.mxu0 %v1519
    %1554 = vmatprep.subr.mxu0 0.0
    %1555 = vmatpush1.xpose.msra.mxu0 %v1522
    %1556 = vmatprep.subr.mxu0 0.0
    %1557 = vmatpush1.xpose.msra.mxu0 0.0
    %1558 = vmatprep.subr.mxu0 0.0
    %1559 = vmatpush1.xpose.msra.mxu0 0.0
    %1560 = vmatprep.subr.mxu0 0.0
    %1561 = vmatpush1.xpose.msra.mxu0 0.0
    %1562 = vmatprep.subr.mxu0 0.0
    %1563 = vmatpush1.xpose.msra.mxu0 0.0
    %1564 = vmatprep.subr.mxu0 0.0
    %1565 = vmatpush1.xpose.msra.mxu0 0.0
    %1566 = vmatprep.subr.mxu0 0.0
    %1567 = vmatpush1.xpose.msra.mxu0 0.0
    %1568 = vmatprep.subr.mxu0 0.0
    %1569 = vmatpush1.xpose.msra.mxu0 0.0
    %1570 = vmatprep.subr.mxu0 0.0
    %1571 = vmatpush1.xpose.msra.mxu0 0.0
    %1572 = vmatprep.subr.mxu0 0.0
    %1573 = vmatpush1.xpose.msra.mxu0 0.0
    %1574 = vmatprep.subr.mxu0 0.0
    %1575 = vmatpush1.xpose.msra.mxu0 0.0
    %1576 = vmatprep.subr.mxu0 0.0
    %1577 = vmatpush1.xpose.msra.mxu0 0.0
    %1578 = vmatprep.subr.mxu0 0.0
    %1579 = vmatpush1.xpose.msra.mxu0 0.0
    %1580 = vmatprep.subr.mxu0 0.0
    %1581 = vmatpush1.xpose.msra.mxu0 0.0
    %1582 = vmatprep.subr.mxu0 0.0
    %1583 = vmatpush1.xpose.msra.mxu0 0.0
    %1584 = vmatprep.subr.mxu0 0.0
    %1585 = vmatpush1.xpose.msra.mxu0 0.0
    %1586 = vmatprep.subr.mxu0 0.0
    %1587 = vmatpush1.xpose.msra.mxu0 0.0
    %1588 = vmatprep.mubr.f32.mxu0 0.0
    %1589 = vmatmul.mubr.f32.gmra.mrb[0].mxu0 %v1474
    %v1590 = vpop.f32.mrb[0].mxu0
    %v1591 = vadd.f32 %v1471, %v1590
    %v1592 = vpop.f32.mrb[0].mxu0
    %1593 = vdwg.mxu0
    %v1595 = vsel %vm172, %v1418, 0
    %v1598 = vsel %vm172, %v1419, 0
    %v1601 = vsel %vm172, %v1420, 0
    %v1604 = vsel %vm172, %v1421, 0
    %v1607 = vsel %vm172, %v1422, 0
    %v1610 = vsel %vm172, %v1423, 0
    %v1613 = vsel %vm172, %v1424, 0
    %v1616 = vsel %vm172, %v1425, 0
    %v1619 = vsel %vm172, %v1426, 0
    %v1622 = vsel %vm172, %v1427, 0
    %v1625 = vsel %vm172, %v1428, 0
    %v1628 = vsel %vm172, %v1429, 0
    %v1631 = vsel %vm172, %v1430, 0
    %v1634 = vsel %vm172, %v1431, 0
    %v1637 = vsel %vm172, %v1432, 0
    %v1640 = vsel %vm172, %v1433, 0
    %1642 = vmatprep.subr.mxu0 0.0
    %1643 = vmatpush1.xpose.msra.mxu0 %v1595
    %1644 = vmatprep.subr.mxu0 0.0
    %1645 = vmatpush1.xpose.msra.mxu0 %v1598
    %1646 = vmatprep.subr.mxu0 0.0
    %1647 = vmatpush1.xpose.msra.mxu0 %v1601
    %1648 = vmatprep.subr.mxu0 0.0
    %1649 = vmatpush1.xpose.msra.mxu0 %v1604
    %1650 = vmatprep.subr.mxu0 0.0
    %1651 = vmatpush1.xpose.msra.mxu0 %v1607
    %1652 = vmatprep.subr.mxu0 0.0
    %1653 = vmatpush1.xpose.msra.mxu0 %v1610
    %1654 = vmatprep.subr.mxu0 0.0
    %1655 = vmatpush1.xpose.msra.mxu0 %v1613
    %1656 = vmatprep.subr.mxu0 0.0
    %1657 = vmatpush1.xpose.msra.mxu0 %v1616
    %1658 = vmatprep.subr.mxu0 0.0
    %1659 = vmatpush1.xpose.msra.mxu0 %v1619
    %1660 = vmatprep.subr.mxu0 0.0
    %1661 = vmatpush1.xpose.msra.mxu0 %v1622
    %1662 = vmatprep.subr.mxu0 0.0
    %1663 = vmatpush1.xpose.msra.mxu0 %v1625
    %1664 = vmatprep.subr.mxu0 0.0
    %1665 = vmatpush1.xpose.msra.mxu0 %v1628
    %1666 = vmatprep.subr.mxu0 0.0
    %1667 = vmatpush1.xpose.msra.mxu0 %v1631
    %1668 = vmatprep.subr.mxu0 0.0
    %1669 = vmatpush1.xpose.msra.mxu0 %v1634
    %1670 = vmatprep.subr.mxu0 0.0
    %1671 = vmatpush1.xpose.msra.mxu0 %v1637
    %1672 = vmatprep.subr.mxu0 0.0
    %1673 = vmatpush1.xpose.msra.mxu0 %v1640
    %1674 = vmatprep.subr.mxu0 0.0
    %1675 = vmatpush1.xpose.msra.mxu0 0.0
    %1676 = vmatprep.subr.mxu0 0.0
    %1677 = vmatpush1.xpose.msra.mxu0 0.0
    %1678 = vmatprep.subr.mxu0 0.0
    %1679 = vmatpush1.xpose.msra.mxu0 0.0
    %1680 = vmatprep.subr.mxu0 0.0
    %1681 = vmatpush1.xpose.msra.mxu0 0.0
    %1682 = vmatprep.subr.mxu0 0.0
    %1683 = vmatpush1.xpose.msra.mxu0 0.0
    %1684 = vmatprep.subr.mxu0 0.0
    %1685 = vmatpush1.xpose.msra.mxu0 0.0
    %1686 = vmatprep.subr.mxu0 0.0
    %1687 = vmatpush1.xpose.msra.mxu0 0.0
    %1688 = vmatprep.subr.mxu0 0.0
    %1689 = vmatpush1.xpose.msra.mxu0 0.0
    %1690 = vmatprep.subr.mxu0 0.0
    %1691 = vmatpush1.xpose.msra.mxu0 0.0
    %1692 = vmatprep.subr.mxu0 0.0
    %1693 = vmatpush1.xpose.msra.mxu0 0.0
    %1694 = vmatprep.subr.mxu0 0.0
    %1695 = vmatpush1.xpose.msra.mxu0 0.0
    %1696 = vmatprep.subr.mxu0 0.0
    %1697 = vmatpush1.xpose.msra.mxu0 0.0
    %1698 = vmatprep.subr.mxu0 0.0
    %1699 = vmatpush1.xpose.msra.mxu0 0.0
    %1700 = vmatprep.subr.mxu0 0.0
    %1701 = vmatpush1.xpose.msra.mxu0 0.0
    %1702 = vmatprep.subr.mxu0 0.0
    %1703 = vmatpush1.xpose.msra.mxu0 0.0
    %1704 = vmatprep.subr.mxu0 0.0
    %1705 = vmatpush1.xpose.msra.mxu0 0.0
    %1706 = vmatprep.mubr.f32.mxu0 0.0
    %1707 = vmatmul.mubr.f32.gmra.mrb[0].mxu0 %v1474
    %v1708 = vpop.f32.mrb[0].mxu0
    %v1709 = vadd.f32 %v1471, %v1708
    %v1710 = vpop.f32.mrb[0].mxu0
    %1711 = vdwg.mxu0
    %v1713 = vsel %vm172, %v1434, 0
    %v1716 = vsel %vm172, %v1435, 0
    %v1719 = vsel %vm172, %v1436, 0
    %v1722 = vsel %vm172, %v1437, 0
    %v1725 = vsel %vm172, %v1438, 0
    %v1728 = vsel %vm172, %v1439, 0
    %v1731 = vsel %vm172, %v1440, 0
    %v1734 = vsel %vm172, %v1441, 0
    %v1737 = vsel %vm172, %v1442, 0
    %v1740 = vsel %vm172, %v1443, 0
    %v1743 = vsel %vm172, %v1444, 0
    %v1746 = vsel %vm172, %v1445, 0
    %v1749 = vsel %vm172, %v1446, 0
    %v1752 = vsel %vm172, %v1447, 0
    %v1755 = vsel %vm172, %v1448, 0
    %v1758 = vsel %vm172, %v1449, 0
    %1760 = vmatprep.subr.mxu0 0.0
    %1761 = vmatpush1.xpose.msra.mxu0 %v1713
    %1762 = vmatprep.subr.mxu0 0.0
    %1763 = vmatpush1.xpose.msra.mxu0 %v1716
    %1764 = vmatprep.subr.mxu0 0.0
    %1765 = vmatpush1.xpose.msra.mxu0 %v1719
    %1766 = vmatprep.subr.mxu0 0.0
    %1767 = vmatpush1.xpose.msra.mxu0 %v1722
    %1768 = vmatprep.subr.mxu0 0.0
    %1769 = vmatpush1.xpose.msra.mxu0 %v1725
    %1770 = vmatprep.subr.mxu0 0.0
    %1771 = vmatpush1.xpose.msra.mxu0 %v1728
    %1772 = vmatprep.subr.mxu0 0.0
    %1773 = vmatpush1.xpose.msra.mxu0 %v1731
    %1774 = vmatprep.subr.mxu0 0.0
    %1775 = vmatpush1.xpose.msra.mxu0 %v1734
    %1776 = vmatprep.subr.mxu0 0.0
    %1777 = vmatpush1.xpose.msra.mxu0 %v1737
    %1778 = vmatprep.subr.mxu0 0.0
    %1779 = vmatpush1.xpose.msra.mxu0 %v1740
    %1780 = vmatprep.subr.mxu0 0.0
    %1781 = vmatpush1.xpose.msra.mxu0 %v1743
    %1782 = vmatprep.subr.mxu0 0.0
    %1783 = vmatpush1.xpose.msra.mxu0 %v1746
    %1784 = vmatprep.subr.mxu0 0.0
    %1785 = vmatpush1.xpose.msra.mxu0 %v1749
    %1786 = vmatprep.subr.mxu0 0.0
    %1787 = vmatpush1.xpose.msra.mxu0 %v1752
    %1788 = vmatprep.subr.mxu0 0.0
    %1789 = vmatpush1.xpose.msra.mxu0 %v1755
    %1790 = vmatprep.subr.mxu0 0.0
    %1791 = vmatpush1.xpose.msra.mxu0 %v1758
    %1792 = vmatprep.subr.mxu0 0.0
    %1793 = vmatpush1.xpose.msra.mxu0 0.0
    %1794 = vmatprep.subr.mxu0 0.0
    %1795 = vmatpush1.xpose.msra.mxu0 0.0
    %1796 = vmatprep.subr.mxu0 0.0
    %1797 = vmatpush1.xpose.msra.mxu0 0.0
    %1798 = vmatprep.subr.mxu0 0.0
    %1799 = vmatpush1.xpose.msra.mxu0 0.0
    %1800 = vmatprep.subr.mxu0 0.0
    %1801 = vmatpush1.xpose.msra.mxu0 0.0
    %1802 = vmatprep.subr.mxu0 0.0
    %1803 = vmatpush1.xpose.msra.mxu0 0.0
    %1804 = vmatprep.subr.mxu0 0.0
    %1805 = vmatpush1.xpose.msra.mxu0 0.0
    %1806 = vmatprep.subr.mxu0 0.0
    %1807 = vmatpush1.xpose.msra.mxu0 0.0
    %1808 = vmatprep.subr.mxu0 0.0
    %1809 = vmatpush1.xpose.msra.mxu0 0.0
    %1810 = vmatprep.subr.mxu0 0.0
    %1811 = vmatpush1.xpose.msra.mxu0 0.0
    %1812 = vmatprep.subr.mxu0 0.0
    %1813 = vmatpush1.xpose.msra.mxu0 0.0
    %1814 = vmatprep.subr.mxu0 0.0
    %1815 = vmatpush1.xpose.msra.mxu0 0.0
    %1816 = vmatprep.subr.mxu0 0.0
    %1817 = vmatpush1.xpose.msra.mxu0 0.0
    %1818 = vmatprep.subr.mxu0 0.0
    %1819 = vmatpush1.xpose.msra.mxu0 0.0
    %1820 = vmatprep.subr.mxu0 0.0
    %1821 = vmatpush1.xpose.msra.mxu0 0.0
    %1822 = vmatprep.subr.mxu0 0.0
    %1823 = vmatpush1.xpose.msra.mxu0 0.0
    %1824 = vmatprep.mubr.f32.mxu0 0.0
    %1825 = vmatmul.mubr.f32.gmra.mrb[0].mxu0 %v1474
    %v1826 = vpop.f32.mrb[0].mxu0
    %v1827 = vadd.f32 %v1471, %v1826
    %v1828 = vpop.f32.mrb[0].mxu0
    %1829 = vdwg.mxu0
    %v1831 = vsel %vm172, %v1450, 0
    %v1834 = vsel %vm172, %v1451, 0
    %v1837 = vsel %vm172, %v1452, 0
    %v1840 = vsel %vm172, %v1453, 0
    %v1843 = vsel %vm172, %v1454, 0
    %v1846 = vsel %vm172, %v1455, 0
    %v1849 = vsel %vm172, %v1456, 0
    %v1852 = vsel %vm172, %v1457, 0
    %v1855 = vsel %vm172, %v1458, 0
    %v1858 = vsel %vm172, %v1459, 0
    %v1861 = vsel %vm172, %v1460, 0
    %v1864 = vsel %vm172, %v1461, 0
    %v1867 = vsel %vm172, %v1462, 0
    %v1870 = vsel %vm172, %v1463, 0
    %v1873 = vsel %vm172, %v1464, 0
    %v1876 = vsel %vm172, %v1465, 0
    %1878 = vmatprep.subr.mxu0 0.0
    %1879 = vmatpush1.xpose.msra.mxu0 %v1831
    %1880 = vmatprep.subr.mxu0 0.0
    %1881 = vmatpush1.xpose.msra.mxu0 %v1834
    %1882 = vmatprep.subr.mxu0 0.0
    %1883 = vmatpush1.xpose.msra.mxu0 %v1837
    %1884 = vmatprep.subr.mxu0 0.0
    %1885 = vmatpush1.xpose.msra.mxu0 %v1840
    %1886 = vmatprep.subr.mxu0 0.0
    %1887 = vmatpush1.xpose.msra.mxu0 %v1843
    %1888 = vmatprep.subr.mxu0 0.0
    %1889 = vmatpush1.xpose.msra.mxu0 %v1846
    %1890 = vmatprep.subr.mxu0 0.0
    %1891 = vmatpush1.xpose.msra.mxu0 %v1849
    %1892 = vmatprep.subr.mxu0 0.0
    %1893 = vmatpush1.xpose.msra.mxu0 %v1852
    %1894 = vmatprep.subr.mxu0 0.0
    %1895 = vmatpush1.xpose.msra.mxu0 %v1855
    %1896 = vmatprep.subr.mxu0 0.0
    %1897 = vmatpush1.xpose.msra.mxu0 %v1858
    %1898 = vmatprep.subr.mxu0 0.0
    %1899 = vmatpush1.xpose.msra.mxu0 %v1861
    %1900 = vmatprep.subr.mxu0 0.0
    %1901 = vmatpush1.xpose.msra.mxu0 %v1864
    %1902 = vmatprep.subr.mxu0 0.0
    %1903 = vmatpush1.xpose.msra.mxu0 %v1867
    %1904 = vmatprep.subr.mxu0 0.0
    %1905 = vmatpush1.xpose.msra.mxu0 %v1870
    %1906 = vmatprep.subr.mxu0 0.0
    %1907 = vmatpush1.xpose.msra.mxu0 %v1873
    %1908 = vmatprep.subr.mxu0 0.0
    %1909 = vmatpush1.xpose.msra.mxu0 %v1876
    %1910 = vmatprep.subr.mxu0 0.0
    %1911 = vmatpush1.xpose.msra.mxu0 0.0
    %1912 = vmatprep.subr.mxu0 0.0
    %1913 = vmatpush1.xpose.msra.mxu0 0.0
    %1914 = vmatprep.subr.mxu0 0.0
    %1915 = vmatpush1.xpose.msra.mxu0 0.0
    %1916 = vmatprep.subr.mxu0 0.0
    %1917 = vmatpush1.xpose.msra.mxu0 0.0
    %1918 = vmatprep.subr.mxu0 0.0
    %1919 = vmatpush1.xpose.msra.mxu0 0.0
    %1920 = vmatprep.subr.mxu0 0.0
    %1921 = vmatpush1.xpose.msra.mxu0 0.0
    %1922 = vmatprep.subr.mxu0 0.0
    %1923 = vmatpush1.xpose.msra.mxu0 0.0
    %1924 = vmatprep.subr.mxu0 0.0
    %1925 = vmatpush1.xpose.msra.mxu0 0.0
    %1926 = vmatprep.subr.mxu0 0.0
    %1927 = vmatpush1.xpose.msra.mxu0 0.0
    %1928 = vmatprep.subr.mxu0 0.0
    %1929 = vmatpush1.xpose.msra.mxu0 0.0
    %1930 = vmatprep.subr.mxu0 0.0
    %1931 = vmatpush1.xpose.msra.mxu0 0.0
    %1932 = vmatprep.subr.mxu0 0.0
    %1933 = vmatpush1.xpose.msra.mxu0 0.0
    %1934 = vmatprep.subr.mxu0 0.0
    %1935 = vmatpush1.xpose.msra.mxu0 0.0
    %1936 = vmatprep.subr.mxu0 0.0
    %1937 = vmatpush1.xpose.msra.mxu0 0.0
    %1938 = vmatprep.subr.mxu0 0.0
    %1939 = vmatpush1.xpose.msra.mxu0 0.0
    %1940 = vmatprep.subr.mxu0 0.0
    %1941 = vmatpush1.xpose.msra.mxu0 0.0
    %1942 = vmatprep.mubr.f32.mxu0 0.0
    %1943 = vmatmul.mubr.f32.gmra.mrb[0].mxu0 %v1474
    %v1944 = vpop.f32.mrb[0].mxu0
    %v1945 = vadd.f32 %v1471, %v1944
    %v1946 = vpop.f32.mrb[0].mxu0
    %1947 = vdwg.mxu0
    %v1948 = vlaneseq
    %v1949 = vand.u32 %v1948, 127
    %vm1950 = vcmp.lt.s32.totalorder %v1949, 16
    %v1951 = vsel %vm1950, %v1591, 0.0
    %v1952 = vsel %vm1950, %v1709, 0.0
    %v1953 = vsel %vm1950, %v1827, 0.0
    %v1954 = vsel %vm1950, %v1945, 0.0
    %1955 = vadd.xlane.f32.xlu0 %v1951
    %v1956 = vpop.xlane.xlu0 %1955
    %1957 = vadd.xlane.f32.xlu0 %v1952
    %v1958 = vpop.xlane.xlu0 %1957
    %1959 = vadd.xlane.f32.xlu0 %v1953
    %v1960 = vpop.xlane.xlu0 %1959
    %1961 = vadd.xlane.f32.xlu0 %v1954
    %v1962 = vpop.xlane.xlu0 %1961
    %v1963 = vrot.slane %v1956, 4
    %v1964 = vadd.f32 %v1956, %v1963
    %v1965 = vrot.slane %v1964, 2
    %v1966 = vadd.f32 %v1964, %v1965
    %v1967 = vrot.slane %v1966, 1
    %v1968 = vadd.f32 %v1966, %v1967
    %v1969 = vrot.slane %v1958, 4
    %v1970 = vadd.f32 %v1958, %v1969
    %v1971 = vrot.slane %v1970, 2
    %v1972 = vadd.f32 %v1970, %v1971
    %v1973 = vrot.slane %v1972, 1
    %v1974 = vadd.f32 %v1972, %v1973
    %v1975 = vrot.slane %v1960, 4
    %v1976 = vadd.f32 %v1960, %v1975
    %v1977 = vrot.slane %v1976, 2
    %v1978 = vadd.f32 %v1976, %v1977
    %v1979 = vrot.slane %v1978, 1
    %v1980 = vadd.f32 %v1978, %v1979
    %v1981 = vrot.slane %v1962, 4
    %v1982 = vadd.f32 %v1962, %v1981
    %v1983 = vrot.slane %v1982, 2
    %v1984 = vadd.f32 %v1982, %v1983
    %v1985 = vrot.slane %v1984, 1
    %v1986 = vadd.f32 %v1984, %v1985
    %vm1987 = vcmp.eq.f32.partialorder %v1956, 0.0
    %vm1988 = vcmp.eq.f32.partialorder %v1958, 0.0
    %vm1989 = vcmp.eq.f32.partialorder %v1960, 0.0
    %vm1990 = vcmp.eq.f32.partialorder %v1962, 0.0
    %v1991 = vsel %vm1987, 1.0, %v1956
    %v1992 = vsel %vm1988, 1.0, %v1958
    %v1993 = vsel %vm1989, 1.0, %v1960
    %v1994 = vsel %vm1990, 1.0, %v1962
    %v1995 = vmul.f32 %v1968, 0.17677669
    %v1996 = vmul.f32 %v1974, 0.17677669
    %v1997 = vmul.f32 %v1980, 0.17677669
    %v1998 = vmul.f32 %v1986, 0.17677669
    %v1999 = vrcp.pop %v1991
    %v2000 = vmul.f32 %v1995, %v1999
    %v2001 = vrcp.pop %v1992
    %v2002 = vmul.f32 %v1996, %v2001
    %v2003 = vrcp.pop %v1993
    %v2004 = vmul.f32 %v1997, %v2003
    %v2005 = vrcp.pop %v1994
    %v2006 = vmul.f32 %v1998, %v2005
    %v2007 = vmul.f32 %v1951, %v2000
    %v2008 = vmul.f32 %v1952, %v2002
    %v2009 = vmul.f32 %v1953, %v2004
    %v2010 = vmul.f32 %v1954, %v2006
    %v2011 = vxor.u32 %v2007, 2147483648
    %v2012 = vxor.u32 %v2008, 2147483648
    %v2013 = vxor.u32 %v2009, 2147483648
    %v2014 = vxor.u32 %v2010, 2147483648
    %v2015 = vmul.f32 %v2011, 1.442695
    %v2016 = vpow.pop %v2015
    %v2017 = vmul.f32 %v2012, 1.442695
    %v2018 = vpow.pop %v2017
    %v2019 = vmul.f32 %v2013, 1.442695
    %v2020 = vpow.pop %v2019
    %v2021 = vmul.f32 %v2014, 1.442695
    %v2022 = vpow.pop %v2021
    %v2023 = vadd.f32 %v2016, 1.0
    %v2024 = vadd.f32 %v2018, 1.0
    %v2025 = vadd.f32 %v2020, 1.0
    %v2026 = vadd.f32 %v2022, 1.0
    %v2027 = vrcp.pop %v2023
    %v2028 = vmul.f32 1.0, %v2027
    %v2029 = vrcp.pop %v2024
    %v2030 = vmul.f32 1.0, %v2029
    %v2031 = vrcp.pop %v2025
    %v2032 = vmul.f32 1.0, %v2031
    %v2033 = vrcp.pop %v2026
    %v2034 = vmul.f32 1.0, %v2033
    %v2035 = vsel %vm1950, %v2028, 0.0
    %v2036 = vsel %vm1950, %v2030, 0.0
    %v2037 = vsel %vm1950, %v2032, 0.0
    %v2038 = vsel %vm1950, %v2034, 0.0
    %2039 = vadd.xlane.f32.xlu0 %v2035
    %v2040 = vpop.xlane.xlu0 %2039
    %2041 = vadd.xlane.f32.xlu0 %v2036
    %v2042 = vpop.xlane.xlu0 %2041
    %2043 = vadd.xlane.f32.xlu0 %v2037
    %v2044 = vpop.xlane.xlu0 %2043
    %2045 = vadd.xlane.f32.xlu0 %v2038
    %v2046 = vpop.xlane.xlu0 %2045
    %v2047 = vadd.f32 %v2040, 1e-08
    %v2048 = vadd.f32 %v2042, 1e-08
    %v2049 = vadd.f32 %v2044, 1e-08
    %v2050 = vadd.f32 %v2046, 1e-08
    %v2051 = vrcp.pop %v2047
    %v2052 = vmul.f32 1.0, %v2051
    %v2053 = vrcp.pop %v2048
    %v2054 = vmul.f32 1.0, %v2053
    %v2055 = vrcp.pop %v2049
    %v2056 = vmul.f32 1.0, %v2055
    %v2057 = vrcp.pop %v2050
    %v2058 = vmul.f32 1.0, %v2057
    %v2059 = vmul.f32 %v2035, %v2052
    %v2060 = vmul.f32 %v2036, %v2054
    %v2061 = vmul.f32 %v2037, %v2056
    %v2062 = vmul.f32 %v2038, %v2058
    %2063 = vmatprep.subr.mxu0 0.0
    %2064 = vmatpush1.msra.mxu0 %v33
    %2065 = vmatprep.subr.mxu0 0.0
    %2066 = vmatpush1.msra.mxu0 %v34
    %2067 = vmatprep.subr.mxu0 0.0
    %2068 = vmatpush1.msra.mxu0 %v35
    %2069 = vmatprep.subr.mxu0 0.0
    %2070 = vmatpush1.msra.mxu0 %v36
    %2071 = vmatprep.subr.mxu0 0.0
    %2072 = vmatpush1.msra.mxu0 %v37
    %2073 = vmatprep.subr.mxu0 0.0
    %2074 = vmatpush1.msra.mxu0 %v38
    %2075 = vmatprep.subr.mxu0 0.0
    %2076 = vmatpush1.msra.mxu0 %v39
    %2077 = vmatprep.subr.mxu0 0.0
    %2078 = vmatpush1.msra.mxu0 %v40
    %2079 = vmatprep.subr.mxu0 0.0
    %2080 = vmatpush1.msra.mxu0 %v41
    %2081 = vmatprep.subr.mxu0 0.0
    %2082 = vmatpush1.msra.mxu0 %v42
    %2083 = vmatprep.subr.mxu0 0.0
    %2084 = vmatpush1.msra.mxu0 %v43
    %2085 = vmatprep.subr.mxu0 0.0
    %2086 = vmatpush1.msra.mxu0 %v44
    %2087 = vmatprep.subr.mxu0 0.0
    %2088 = vmatpush1.msra.mxu0 %v45
    %2089 = vmatprep.subr.mxu0 0.0
    %2090 = vmatpush1.msra.mxu0 %v46
    %2091 = vmatprep.subr.mxu0 0.0
    %2092 = vmatpush1.msra.mxu0 %v47
    %2093 = vmatprep.subr.mxu0 0.0
    %2094 = vmatpush1.msra.mxu0 %v48
    %2095 = vmatprep.subr.mxu0 0.0
    %2096 = vmatpush1.msra.mxu0 0.0
    %2097 = vmatprep.subr.mxu0 0.0
    %2098 = vmatpush1.msra.mxu0 0.0
    %2099 = vmatprep.subr.mxu0 0.0
    %2100 = vmatpush1.msra.mxu0 0.0
    %2101 = vmatprep.subr.mxu0 0.0
    %2102 = vmatpush1.msra.mxu0 0.0
    %2103 = vmatprep.subr.mxu0 0.0
    %2104 = vmatpush1.msra.mxu0 0.0
    %2105 = vmatprep.subr.mxu0 0.0
    %2106 = vmatpush1.msra.mxu0 0.0
    %2107 = vmatprep.subr.mxu0 0.0
    %2108 = vmatpush1.msra.mxu0 0.0
    %2109 = vmatprep.subr.mxu0 0.0
    %2110 = vmatpush1.msra.mxu0 0.0
    %2111 = vmatprep.subr.mxu0 0.0
    %2112 = vmatpush1.msra.mxu0 0.0
    %2113 = vmatprep.subr.mxu0 0.0
    %2114 = vmatpush1.msra.mxu0 0.0
    %2115 = vmatprep.subr.mxu0 0.0
    %2116 = vmatpush1.msra.mxu0 0.0
    %2117 = vmatprep.subr.mxu0 0.0
    %2118 = vmatpush1.msra.mxu0 0.0
    %2119 = vmatprep.subr.mxu0 0.0
    %2120 = vmatpush1.msra.mxu0 0.0
    %2121 = vmatprep.subr.mxu0 0.0
    %2122 = vmatpush1.msra.mxu0 0.0
    %2123 = vmatprep.subr.mxu0 0.0
    %2124 = vmatpush1.msra.mxu0 0.0
    %2125 = vmatprep.subr.mxu0 0.0
    %2126 = vmatpush1.msra.mxu0 0.0
    %2127 = vmatprep.mubr.f32.mxu0 0.0
    %2128 = vmatmul.mubr.f32.gmra.mrb[0].mxu0 %v2059
    %v2129 = vpop.f32.mrb[0].mxu0
    %v2130 = vadd.f32 0.0, %v2129
    %v2131 = vpop.f32.mrb[0].mxu0
    %2132 = vdwg.mxu0
    %2133 = vmatprep.subr.mxu0 0.0
    %2134 = vmatpush1.msra.mxu0 %v49
    %2135 = vmatprep.subr.mxu0 0.0
    %2136 = vmatpush1.msra.mxu0 %v50
    %2137 = vmatprep.subr.mxu0 0.0
    %2138 = vmatpush1.msra.mxu0 %v51
    %2139 = vmatprep.subr.mxu0 0.0
    %2140 = vmatpush1.msra.mxu0 %v52
    %2141 = vmatprep.subr.mxu0 0.0
    %2142 = vmatpush1.msra.mxu0 %v53
    %2143 = vmatprep.subr.mxu0 0.0
    %2144 = vmatpush1.msra.mxu0 %v54
    %2145 = vmatprep.subr.mxu0 0.0
    %2146 = vmatpush1.msra.mxu0 %v55
    %2147 = vmatprep.subr.mxu0 0.0
    %2148 = vmatpush1.msra.mxu0 %v56
    %2149 = vmatprep.subr.mxu0 0.0
    %2150 = vmatpush1.msra.mxu0 %v57
    %2151 = vmatprep.subr.mxu0 0.0
    %2152 = vmatpush1.msra.mxu0 %v58
    %2153 = vmatprep.subr.mxu0 0.0
    %2154 = vmatpush1.msra.mxu0 %v59
    %2155 = vmatprep.subr.mxu0 0.0
    %2156 = vmatpush1.msra.mxu0 %v60
    %2157 = vmatprep.subr.mxu0 0.0
    %2158 = vmatpush1.msra.mxu0 %v61
    %2159 = vmatprep.subr.mxu0 0.0
    %2160 = vmatpush1.msra.mxu0 %v62
    %2161 = vmatprep.subr.mxu0 0.0
    %2162 = vmatpush1.msra.mxu0 %v63
    %2163 = vmatprep.subr.mxu0 0.0
    %2164 = vmatpush1.msra.mxu0 %v64
    %2165 = vmatprep.subr.mxu0 0.0
    %2166 = vmatpush1.msra.mxu0 0.0
    %2167 = vmatprep.subr.mxu0 0.0
    %2168 = vmatpush1.msra.mxu0 0.0
    %2169 = vmatprep.subr.mxu0 0.0
    %2170 = vmatpush1.msra.mxu0 0.0
    %2171 = vmatprep.subr.mxu0 0.0
    %2172 = vmatpush1.msra.mxu0 0.0
    %2173 = vmatprep.subr.mxu0 0.0
    %2174 = vmatpush1.msra.mxu0 0.0
    %2175 = vmatprep.subr.mxu0 0.0
    %2176 = vmatpush1.msra.mxu0 0.0
    %2177 = vmatprep.subr.mxu0 0.0
    %2178 = vmatpush1.msra.mxu0 0.0
    %2179 = vmatprep.subr.mxu0 0.0
    %2180 = vmatpush1.msra.mxu0 0.0
    %2181 = vmatprep.subr.mxu0 0.0
    %2182 = vmatpush1.msra.mxu0 0.0
    %2183 = vmatprep.subr.mxu0 0.0
    %2184 = vmatpush1.msra.mxu0 0.0
    %2185 = vmatprep.subr.mxu0 0.0
    %2186 = vmatpush1.msra.mxu0 0.0
    %2187 = vmatprep.subr.mxu0 0.0
    %2188 = vmatpush1.msra.mxu0 0.0
    %2189 = vmatprep.subr.mxu0 0.0
    %2190 = vmatpush1.msra.mxu0 0.0
    %2191 = vmatprep.subr.mxu0 0.0
    %2192 = vmatpush1.msra.mxu0 0.0
    %2193 = vmatprep.subr.mxu0 0.0
    %2194 = vmatpush1.msra.mxu0 0.0
    %2195 = vmatprep.subr.mxu0 0.0
    %2196 = vmatpush1.msra.mxu0 0.0
    %2197 = vmatprep.mubr.f32.mxu0 0.0
    %2198 = vmatmul.mubr.f32.gmra.mrb[0].mxu0 %v2060
    %v2199 = vpop.f32.mrb[0].mxu0
    %v2200 = vadd.f32 0.0, %v2199
    %v2201 = vpop.f32.mrb[0].mxu0
    %2202 = vdwg.mxu0
    %2203 = vmatprep.subr.mxu0 0.0
    %2204 = vmatpush1.msra.mxu0 %v65
    %2205 = vmatprep.subr.mxu0 0.0
    %2206 = vmatpush1.msra.mxu0 %v66
    %2207 = vmatprep.subr.mxu0 0.0
    %2208 = vmatpush1.msra.mxu0 %v67
    %2209 = vmatprep.subr.mxu0 0.0
    %2210 = vmatpush1.msra.mxu0 %v68
    %2211 = vmatprep.subr.mxu0 0.0
    %2212 = vmatpush1.msra.mxu0 %v69
    %2213 = vmatprep.subr.mxu0 0.0
    %2214 = vmatpush1.msra.mxu0 %v70
    %2215 = vmatprep.subr.mxu0 0.0
    %2216 = vmatpush1.msra.mxu0 %v71
    %2217 = vmatprep.subr.mxu0 0.0
    %2218 = vmatpush1.msra.mxu0 %v72
    %2219 = vmatprep.subr.mxu0 0.0
    %2220 = vmatpush1.msra.mxu0 %v73
    %2221 = vmatprep.subr.mxu0 0.0
    %2222 = vmatpush1.msra.mxu0 %v74
    %2223 = vmatprep.subr.mxu0 0.0
    %2224 = vmatpush1.msra.mxu0 %v75
    %2225 = vmatprep.subr.mxu0 0.0
    %2226 = vmatpush1.msra.mxu0 %v76
    %2227 = vmatprep.subr.mxu0 0.0
    %2228 = vmatpush1.msra.mxu0 %v77
    %2229 = vmatprep.subr.mxu0 0.0
    %2230 = vmatpush1.msra.mxu0 %v78
    %2231 = vmatprep.subr.mxu0 0.0
    %2232 = vmatpush1.msra.mxu0 %v79
    %2233 = vmatprep.subr.mxu0 0.0
    %2234 = vmatpush1.msra.mxu0 %v80
    %2235 = vmatprep.subr.mxu0 0.0
    %2236 = vmatpush1.msra.mxu0 0.0
    %2237 = vmatprep.subr.mxu0 0.0
    %2238 = vmatpush1.msra.mxu0 0.0
    %2239 = vmatprep.subr.mxu0 0.0
    %2240 = vmatpush1.msra.mxu0 0.0
    %2241 = vmatprep.subr.mxu0 0.0
    %2242 = vmatpush1.msra.mxu0 0.0
    %2243 = vmatprep.subr.mxu0 0.0
    %2244 = vmatpush1.msra.mxu0 0.0
    %2245 = vmatprep.subr.mxu0 0.0
    %2246 = vmatpush1.msra.mxu0 0.0
    %2247 = vmatprep.subr.mxu0 0.0
    %2248 = vmatpush1.msra.mxu0 0.0
    %2249 = vmatprep.subr.mxu0 0.0
    %2250 = vmatpush1.msra.mxu0 0.0
    %2251 = vmatprep.subr.mxu0 0.0
    %2252 = vmatpush1.msra.mxu0 0.0
    %2253 = vmatprep.subr.mxu0 0.0
    %2254 = vmatpush1.msra.mxu0 0.0
    %2255 = vmatprep.subr.mxu0 0.0
    %2256 = vmatpush1.msra.mxu0 0.0
    %2257 = vmatprep.subr.mxu0 0.0
    %2258 = vmatpush1.msra.mxu0 0.0
    %2259 = vmatprep.subr.mxu0 0.0
    %2260 = vmatpush1.msra.mxu0 0.0
    %2261 = vmatprep.subr.mxu0 0.0
    %2262 = vmatpush1.msra.mxu0 0.0
    %2263 = vmatprep.subr.mxu0 0.0
    %2264 = vmatpush1.msra.mxu0 0.0
    %2265 = vmatprep.subr.mxu0 0.0
    %2266 = vmatpush1.msra.mxu0 0.0
    %2267 = vmatprep.mubr.f32.mxu0 0.0
    %2268 = vmatmul.mubr.f32.gmra.mrb[0].mxu0 %v2061
    %v2269 = vpop.f32.mrb[0].mxu0
    %v2270 = vadd.f32 0.0, %v2269
    %v2271 = vpop.f32.mrb[0].mxu0
    %2272 = vdwg.mxu0
    %2273 = vmatprep.subr.mxu0 0.0
    %2274 = vmatpush1.msra.mxu0 %v81
    %2275 = vmatprep.subr.mxu0 0.0
    %2276 = vmatpush1.msra.mxu0 %v82
    %2277 = vmatprep.subr.mxu0 0.0
    %2278 = vmatpush1.msra.mxu0 %v83
    %2279 = vmatprep.subr.mxu0 0.0
    %2280 = vmatpush1.msra.mxu0 %v84
    %2281 = vmatprep.subr.mxu0 0.0
    %2282 = vmatpush1.msra.mxu0 %v85
    %2283 = vmatprep.subr.mxu0 0.0
    %2284 = vmatpush1.msra.mxu0 %v86
    %2285 = vmatprep.subr.mxu0 0.0
    %2286 = vmatpush1.msra.mxu0 %v87
    %2287 = vmatprep.subr.mxu0 0.0
    %2288 = vmatpush1.msra.mxu0 %v88
    %2289 = vmatprep.subr.mxu0 0.0
    %2290 = vmatpush1.msra.mxu0 %v89
    %2291 = vmatprep.subr.mxu0 0.0
    %2292 = vmatpush1.msra.mxu0 %v90
    %2293 = vmatprep.subr.mxu0 0.0
    %2294 = vmatpush1.msra.mxu0 %v91
    %2295 = vmatprep.subr.mxu0 0.0
    %2296 = vmatpush1.msra.mxu0 %v92
    %2297 = vmatprep.subr.mxu0 0.0
    %2298 = vmatpush1.msra.mxu0 %v93
    %2299 = vmatprep.subr.mxu0 0.0
    %2300 = vmatpush1.msra.mxu0 %v94
    %2301 = vmatprep.subr.mxu0 0.0
    %2302 = vmatpush1.msra.mxu0 %v95
    %2303 = vmatprep.subr.mxu0 0.0
    %2304 = vmatpush1.msra.mxu0 %v96
    %2305 = vmatprep.subr.mxu0 0.0
    %2306 = vmatpush1.msra.mxu0 0.0
    %2307 = vmatprep.subr.mxu0 0.0
    %2308 = vmatpush1.msra.mxu0 0.0
    %2309 = vmatprep.subr.mxu0 0.0
    %2310 = vmatpush1.msra.mxu0 0.0
    %2311 = vmatprep.subr.mxu0 0.0
    %2312 = vmatpush1.msra.mxu0 0.0
    %2313 = vmatprep.subr.mxu0 0.0
    %2314 = vmatpush1.msra.mxu0 0.0
    %2315 = vmatprep.subr.mxu0 0.0
    %2316 = vmatpush1.msra.mxu0 0.0
    %2317 = vmatprep.subr.mxu0 0.0
    %2318 = vmatpush1.msra.mxu0 0.0
    %2319 = vmatprep.subr.mxu0 0.0
    %2320 = vmatpush1.msra.mxu0 0.0
    %2321 = vmatprep.subr.mxu0 0.0
    %2322 = vmatpush1.msra.mxu0 0.0
    %2323 = vmatprep.subr.mxu0 0.0
    %2324 = vmatpush1.msra.mxu0 0.0
    %2325 = vmatprep.subr.mxu0 0.0
    %2326 = vmatpush1.msra.mxu0 0.0
    %2327 = vmatprep.subr.mxu0 0.0
    %2328 = vmatpush1.msra.mxu0 0.0
    %2329 = vmatprep.subr.mxu0 0.0
    %2330 = vmatpush1.msra.mxu0 0.0
    %2331 = vmatprep.subr.mxu0 0.0
    %2332 = vmatpush1.msra.mxu0 0.0
    %2333 = vmatprep.subr.mxu0 0.0
    %2334 = vmatpush1.msra.mxu0 0.0
    %2335 = vmatprep.subr.mxu0 0.0
    %2336 = vmatpush1.msra.mxu0 0.0
    %2337 = vmatprep.mubr.f32.mxu0 0.0
    %2338 = vmatmul.mubr.f32.gmra.mrb[0].mxu0 %v2062
    %v2339 = vpop.f32.mrb[0].mxu0
    %v2340 = vadd.f32 0.0, %v2339
    %v2341 = vpop.f32.mrb[0].mxu0
    %2342 = vdwg.mxu0
    %2343 = vst.msk [vmem:[#allocation2] sm:$0xff] %vm172, %v2130
    %2344 = vst.msk [vmem:[#allocation2 + $0x8] sm:$0xff] %vm172, %v2200
    %2345 = vst.msk [vmem:[#allocation2 + $0x10] sm:$0xff] %vm172, %v2270
    %2346 = vst.msk [vmem:[#allocation2 + $0x18] sm:$0xff] %vm172, %v2340
    %2347 = vst [vmem:[#allocation4] sm:$0xff] %v2035
    %2348 = vst [vmem:[#allocation4 + $0x8] sm:$0xff] %v2036
    %2349 = vst [vmem:[#allocation4 + $0x10] sm:$0xff] %v2037
    %2350 = vst [vmem:[#allocation4 + $0x18] sm:$0xff] %v2038
    // Predicated region
    $region34: #{tpu_custom_call.1} parent=1 // pred_check
      _
    $region35: #{tpu_custom_call.1} parent=1 // pred_check_branch
      %2352 = sbr.rel (0) target = $region37
    $region36: #{tpu_custom_call.1} parent=1 // pred_region
      %s2354 = ssub.s32 512, 512
      %2355 = vsyncadd [#allocation3], %s2354
      %s2356 = sshll.u32 [#allocation2], 4
      %s2357 = int_to_ptr.vmem [resolvable:$true] %s2356
      %2362 = dma.vmem_to_hbm [thread:$0]  %s2357, 512, %s8, [#allocation3], 128, 128, 8
    $region37: #{tpu_custom_call.1} parent=1 // pred_fallthru
      _
    // Predicated region
    $region38: #{tpu_custom_call.1} parent=1 // pred_check
      _
    $region39: #{tpu_custom_call.1} parent=1 // pred_check_branch
      %2364 = sbr.rel (0) target = $region41
    $region40: #{tpu_custom_call.1} parent=1 // pred_region
      %s2366 = ssub.s32 512, 512
      %2367 = vsyncadd [#allocation5], %s2366
      %s2368 = sshll.u32 [#allocation4], 4
      %s2369 = int_to_ptr.vmem [resolvable:$true] %s2368
      %2374 = dma.vmem_to_hbm [thread:$0]  %s2369, 512, %s9, [#allocation5], 128, 128, 8
    $region41: #{tpu_custom_call.1} parent=1 // pred_fallthru
      _
    // Predicated region
    $region42: #{tpu_custom_call.1} parent=1 // pred_check
      _
    $region43: #{tpu_custom_call.1} parent=1 // pred_check_branch
      %2376 = sbr.rel (0) target = $region45
    $region44: #{tpu_custom_call.1} parent=1 // pred_region
      %2377 = dma.done [#allocation3], 512
    $region45: #{tpu_custom_call.1} parent=1 // pred_fallthru
      _
    // Predicated region
    $region46: #{tpu_custom_call.1} parent=1 // pred_check
      _
    $region47: #{tpu_custom_call.1} parent=1 // pred_check_branch
      %2379 = sbr.rel (0) target = $region49
    $region48: #{tpu_custom_call.1} parent=1 // pred_region
      %2380 = dma.done [#allocation5], 512
    $region49: #{tpu_custom_call.1} parent=1 // pred_fallthru
      _
    %2381 = vsyncpa [#allocation3], 1
    %2382 = vsyncpa [#allocation5], 1

</llo_original>
